<compile_context>
chip_gen: v7x
topology: tpu7x:2x2x1
jax: 0.10.0
libtpu: 0.0.40
codegen_flags: <defaults>
</compile_context>

<pallas_src>
import jax
import jax.numpy as jnp
from jax.experimental import pallas as pl
from jax.experimental.pallas import tpu as pltpu

N_EMBD = 256
BLOCK_SIZE = 8               # T (sequence length)
N_HEADS = 4
HEAD_SIZE = N_EMBD // N_HEADS
HALF = HEAD_SIZE // 2
EPS = 1e-5
N_LAYERS = 4                 # number of fused Blocks demonstrated in __main__

# The MHA result is discarded by the reference Block.forward; keep it off the
# hot path.  Flip only for parity testing of the dead branch.
RUN_DISCARDED_MHA_BRANCH = False


# ---------------------------------------------------------------------------
# Fused multi-layer FFN-Block kernel (grid over the layer axis)
#   per layer:  x <- FeedForward(ln1(x)) + x     (exactly what Block returns)
# The output block has a constant index_map, so it stays resident in VMEM for
# the whole grid and serves as the activation carry between layers.
# ---------------------------------------------------------------------------
def _fused_ffn_blocks_kernel(x_ref, g_ref, b_ref, w1_ref, b1_ref, w2_ref, b2_ref,
                             o_ref):
    l = pl.program_id(0)

    @pl.when(l == 0)
    def _():
        o_ref[...] = x_ref[...]              # load the input activation once

    x = o_ref[...]                           # (B, T, C) f32 activation carry
    B, T, C = x.shape

    # Reference LayerNorm: mean / unbiased variance over dim=1 (T), affine on C.
    mean = jnp.mean(x, axis=1, keepdims=True)
    diff = x - mean
    var = jnp.sum(diff * diff, axis=1, keepdims=True) * (1.0 / (T - 1))
    h = g_ref[...] * (diff * jax.lax.rsqrt(var + EPS)) + b_ref[...]   # (1,1,C) bcast

    # FFN as two flat 2D GEMMs: bf16 MXU inputs, f32 accumulation.
    h2d = h.reshape(B * T, C).astype(jnp.bfloat16)
    h1 = jnp.dot(h2d, w1_ref[0], preferred_element_type=jnp.float32) + b1_ref[0]
    h1 = jnp.maximum(h1, 0.0)                                          # ReLU
    h2 = jnp.dot(h1.astype(jnp.bfloat16), w2_ref[0],
                 preferred_element_type=jnp.float32) + b2_ref[0]

    o_ref[...] = h2.reshape(B, T, C) + x                               # residual


def fused_blocks_forward(x, p):
    """Apply L stacked Blocks (ffn(ln1(x)) + x per layer) in one pallas_call."""
    B, T, C = x.shape
    L = p["w1"].shape[0]
    return pl.pallas_call(
        _fused_ffn_blocks_kernel,
        out_shape=jax.ShapeDtypeStruct(x.shape, x.dtype),
        grid_spec=pltpu.PrefetchScalarGridSpec(
            num_scalar_prefetch=0,
            grid=(L,),
            in_specs=[
                pl.BlockSpec((B, T, C),     lambda l: (0, 0, 0)),   # x (loaded once)
                pl.BlockSpec((1, 1, C),     lambda l: (l, 0, 0)),   # ln gamma
                pl.BlockSpec((1, 1, C),     lambda l: (l, 0, 0)),   # ln beta
                pl.BlockSpec((1, C, 4 * C), lambda l: (l, 0, 0)),   # w1 (bf16)
                pl.BlockSpec((1, 1, 4 * C), lambda l: (l, 0, 0)),   # b1
                pl.BlockSpec((1, 4 * C, C), lambda l: (l, 0, 0)),   # w2 (bf16)
                pl.BlockSpec((1, 1, C),     lambda l: (l, 0, 0)),   # b2
            ],
            out_specs=pl.BlockSpec((B, T, C), lambda l: (0, 0, 0)),
        ),
        compiler_params=pltpu.CompilerParams(
            dimension_semantics=("arbitrary",),   # layer axis is a sequential carry
        ),
    )(x, p["ln_gamma"], p["ln_beta"], p["w1"], p["b1"], p["w2"], p["b2"])


def block_forward(x, p):
    """Single Block.forward (original module semantics): L=1 slice of the fused kernel."""
    return fused_blocks_forward(x, p)


# ---------------------------------------------------------------------------
# MHA branch kernel (DEAD code in the reference — flag-guarded, off by default)
#   out = MultiHeadAttention(ln1(x)) + x
# Batched over heads: (B*H, T, D) einsums instead of a per-head Python loop.
# ---------------------------------------------------------------------------
def _mha_branch_kernel(x_ref, g_ref, b_ref, wq_ref, wk_ref, wv_ref,
                       wo_ref, bo_ref, cos_ref, sin_ref, mask_ref, o_ref):
    x = x_ref[...]                                                # (B, T, C)
    B, T, C = x.shape
    mean = jnp.mean(x, axis=1, keepdims=True)
    diff = x - mean
    var = jnp.sum(diff * diff, axis=1, keepdims=True) * (1.0 / (T - 1))
    h = g_ref[...] * (diff * jax.lax.rsqrt(var + EPS)) + b_ref[...]
    h2d = h.reshape(B * T, C).astype(jnp.bfloat16)

    q = jnp.dot(h2d, wq_ref[...], preferred_element_type=jnp.float32)
    k = jnp.dot(h2d, wk_ref[...], preferred_element_type=jnp.float32)
    v = jnp.dot(h2d, wv_ref[...], preferred_element_type=jnp.float32)

    q4 = q.reshape(B, T, N_HEADS, HEAD_SIZE)
    k4 = k.reshape(B, T, N_HEADS, HEAD_SIZE)
    v4 = v.reshape(B, T, N_HEADS, HEAD_SIZE)

    cos = cos_ref[...][None, :, None, :]                          # (1, T, 1, HALF)
    sin = sin_ref[...][None, :, None, :]

    def rope(t4):   # q/k weight columns were de-interleaved per head on the host
        te, to = t4[..., :HALF], t4[..., HALF:]
        return jnp.concatenate([te * cos - to * sin, te * sin + to * cos], axis=-1)

    qr = rope(q4).transpose(0, 2, 1, 3).reshape(B * N_HEADS, T, HEAD_SIZE)
    kr = rope(k4).transpose(0, 2, 1, 3).reshape(B * N_HEADS, T, HEAD_SIZE)
    vr = v4.transpose(0, 2, 1, 3).reshape(B * N_HEADS, T, HEAD_SIZE)

    scale = HEAD_SIZE ** -0.5
    wei = jnp.einsum("ztd,zsd->zts", qr, kr,
                     preferred_element_type=jnp.float32) * scale
    wei = wei + mask_ref[...][None]                               # additive causal mask
    wei = wei - jnp.max(wei, axis=-1, keepdims=True)
    pmat = jnp.exp(wei)
    pmat = pmat / jnp.sum(pmat, axis=-1, keepdims=True)           # softmax
    att = jnp.einsum("zts,zsd->ztd", pmat, vr,
                     preferred_element_type=jnp.float32)

    cat = att.reshape(B, N_HEADS, T, HEAD_SIZE).transpose(0, 2, 1, 3).reshape(B * T, C)
    proj = jnp.dot(cat.astype(jnp.bfloat16), wo_ref[...],
                   preferred_element_type=jnp.float32) + bo_ref[...]
    o_ref[...] = proj.reshape(B, T, C) + x                        # residual


def mha_branch(x, p):
    """Dead branch of the reference forward; only for parity testing."""
    vs = pl.BlockSpec(memory_space=pltpu.MemorySpace.VMEM)
    return pl.pallas_call(
        _mha_branch_kernel,
        out_shape=jax.ShapeDtypeStruct(x.shape, x.dtype),
        in_specs=[vs] * 11,
        out_specs=vs,
    )(x, p["ln_gamma"], p["ln_beta"], p["wq"], p["wk"], p["wv"],
      p["wo"], p["bo"], p["rope_cos"], p["rope_sin"], p["causal_add_mask"])


# ---------------------------------------------------------------------------
# host-side parameter construction
# ---------------------------------------------------------------------------
def init_stacked_params(key, n_layers):
    """Stacked FFN-Block parameters for the fused layer-grid kernel."""
    C = N_EMBD
    s = 0.02
    keys = jax.random.split(key, n_layers)
    w1s, w2s = [], []
    for k in keys:
        k1, k2 = jax.random.split(k)
        w1s.append(jax.random.normal(k1, (C, 4 * C), jnp.float32) * s)
        w2s.append(jax.random.normal(k2, (4 * C, C), jnp.float32) * s)
    return dict(
        ln_gamma=jnp.ones((n_layers, 1, C), jnp.float32),
        ln_beta=jnp.zeros((n_layers, 1, C), jnp.float32),
        w1=jnp.stack(w1s).astype(jnp.bfloat16),        # (L, C, 4C) bf16
        b1=jnp.zeros((n_layers, 1, 4 * C), jnp.float32),
        w2=jnp.stack(w2s).astype(jnp.bfloat16),        # (L, 4C, C) bf16
        b2=jnp.zeros((n_layers, 1, C), jnp.float32),
    )


def _deinterleave_head_cols(w):
    """Permute (C, C) q/k projection so each head's outputs are [even | odd]."""
    cols = []
    for h in range(N_HEADS):
        wh = w[:, h * HEAD_SIZE:(h + 1) * HEAD_SIZE]
        cols.append(jnp.concatenate([wh[:, 0::2], wh[:, 1::2]], axis=1))
    return jnp.concatenate(cols, axis=1)


def init_attn_params(key):
    """Parameters for the (dead) MHA branch; only built when parity testing."""
    C = N_EMBD
    s = 0.02
    ks = jax.random.split(key, 4)
    wq = jax.random.normal(ks[0], (C, C), jnp.float32) * s
    wk = jax.random.normal(ks[1], (C, C), jnp.float32) * s
    wv = jax.random.normal(ks[2], (C, C), jnp.float32) * s
    wo = jax.random.normal(ks[3], (C, C), jnp.float32) * s
    inv_freq = 1.0 / (10000.0 ** (jnp.arange(0, HEAD_SIZE, 2, dtype=jnp.float32) / HEAD_SIZE))
    t = jnp.arange(BLOCK_SIZE, dtype=jnp.float32)
    angles = jnp.einsum("i,j->ij", t, inv_freq)                   # (T, HALF)
    tri = jnp.tril(jnp.ones((BLOCK_SIZE, BLOCK_SIZE), jnp.float32))
    return dict(
        ln_gamma=jnp.ones((1, 1, C), jnp.float32),
        ln_beta=jnp.zeros((1, 1, C), jnp.float32),
        wq=_deinterleave_head_cols(wq).astype(jnp.bfloat16),
        wk=_deinterleave_head_cols(wk).astype(jnp.bfloat16),
        wv=wv.astype(jnp.bfloat16),
        wo=wo.astype(jnp.bfloat16),
        bo=jnp.zeros((1, C), jnp.float32),
        rope_cos=jnp.cos(angles),
        rope_sin=jnp.sin(angles),
        causal_add_mask=jnp.where(tri > 0, 0.0, -1e30).astype(jnp.float32),
    )


# ---------------------------------------------------------------------------
# pure-JAX reference of the returned value (ffn(ln1(x)) + x per layer), used
# to sanity-check the fused kernel; mirrors the kernel's bf16 matmul inputs.
# ---------------------------------------------------------------------------
def _blocks_reference(x, p):
    L = p["w1"].shape[0]
    T, C = x.shape[1], x.shape[2]
    for l in range(L):
        mean = jnp.mean(x, axis=1, keepdims=True)
        diff = x - mean
        var = jnp.sum(diff * diff, axis=1, keepdims=True) / (T - 1)
        h = p["ln_gamma"][l] * (diff / jnp.sqrt(var + EPS)) + p["ln_beta"][l]
        h2d = h.reshape(-1, C).astype(jnp.bfloat16)
        h1 = jnp.maximum(jnp.dot(h2d, p["w1"][l],
                                 preferred_element_type=jnp.float32) + p["b1"][l], 0.0)
        h2 = jnp.dot(h1.astype(jnp.bfloat16), p["w2"][l],
                     preferred_element_type=jnp.float32) + p["b2"][l]
        x = h2.reshape(x.shape) + x
    return x


if __name__ == "__main__":
    B, T, C = 2, BLOCK_SIZE, N_EMBD
    key = jax.random.PRNGKey(0)
    kx, kp = jax.random.split(key)
    x = jax.random.normal(kx, (B, T, C), jnp.float32)

    # Reference Block.forward:
    #   out = mha(ln1(x)) + x     <- computed, then overwritten (DEAD: skipped here)
    #   out = ffn(ln1(x)) + x     <- the returned value
    if RUN_DISCARDED_MHA_BRANCH:
        attn_params = init_attn_params(jax.random.fold_in(kp, 1))
        _ = jax.block_until_ready(mha_branch(x, attn_params))   # parity-only

    # L fused Blocks in one pallas_call (layer-grid pipelining of weight DMA).
    stacked = init_stacked_params(kp, N_LAYERS)
    out_stack = fused_blocks_forward(x, stacked)
    jax.block_until_ready(out_stack)

    # Single Block (original module semantics) = L=1 slice of the same kernel.
    params1 = jax.tree_util.tree_map(lambda a: a[:1], stacked)
    out1 = block_forward(x, params1)
    jax.block_until_ready(out1)

    assert out_stack.shape == (B, T, C) and out_stack.dtype == jnp.float32
    assert out1.shape == (B, T, C) and out1.dtype == jnp.float32
    assert bool(jnp.all(jnp.isfinite(out_stack))) and bool(jnp.all(jnp.isfinite(out1)))

    ref_stack = _blocks_reference(x, stacked)
    ref_one = _blocks_reference(x, params1)
    assert bool(jnp.allclose(out_stack, ref_stack, atol=1e-2, rtol=1e-2))
    assert bool(jnp.allclose(out1, ref_one, atol=1e-2, rtol=1e-2))

    print("KERNEL_OK")
</pallas_src>

<mosaic_0001>
module attributes {stable_mosaic.version = 11 : i64} {
  func.func @_fused_ffn_blocks_kernel(%arg0: i32, %arg1: memref<2x8x256xf32, #tpu.memory_space<vmem>>, %arg2: memref<1x1x256xf32, #tpu.memory_space<vmem>>, %arg3: memref<1x1x256xf32, #tpu.memory_space<vmem>>, %arg4: memref<1x256x1024xbf16, #tpu.memory_space<vmem>>, %arg5: memref<1x1x1024xf32, #tpu.memory_space<vmem>>, %arg6: memref<1x1024x256xbf16, #tpu.memory_space<vmem>>, %arg7: memref<1x1x256xf32, #tpu.memory_space<vmem>>, %arg8: memref<2x8x256xf32, #tpu.memory_space<vmem>>) attributes {dimension_semantics = [#tpu.dimension_semantics<arbitrary>], iteration_bounds = array<i64: 4>, scalar_prefetch = 0 : i64, scratch_operands = 0 : i64, tpu.core_type = #tpu.core_type<tc>, window_params = [{pipeline_mode = #tpu.pipeline_mode<synchronous>, transform_indices = @transform_0, window_bounds = array<i64: 2, 8, 256>}, {transform_indices = @transform_1, window_bounds = array<i64: 1, 1, 256>}, {transform_indices = @transform_2, window_bounds = array<i64: 1, 1, 256>}, {transform_indices = @transform_3, window_bounds = array<i64: 1, 256, 1024>}, {transform_indices = @transform_4, window_bounds = array<i64: 1, 1, 1024>}, {transform_indices = @transform_5, window_bounds = array<i64: 1, 1024, 256>}, {transform_indices = @transform_6, window_bounds = array<i64: 1, 1, 256>}, {pipeline_mode = #tpu.pipeline_mode<synchronous>, transform_indices = @transform_7, window_bounds = array<i64: 2, 8, 256>}]} {
    %c0_i32 = arith.constant 0 : i32
    %0 = arith.cmpi eq, %arg0, %c0_i32 : i32
    %1 = arith.extui %0 : i1 to i32
    %c0_i32_0 = arith.constant 0 : i32
    %2 = arith.cmpi ne, %1, %c0_i32_0 : i32
    scf.if %2 {
      %c0_31 = arith.constant 0 : index
      %c0_32 = arith.constant 0 : index
      %c0_33 = arith.constant 0 : index
      %48 = vector.load %arg1[%c0_31, %c0_32, %c0_33] : memref<2x8x256xf32, #tpu.memory_space<vmem>>, vector<2x8x256xf32>
      %c0_34 = arith.constant 0 : index
      %c0_35 = arith.constant 0 : index
      %c0_36 = arith.constant 0 : index
      %49 = vector.load %arg8[%c0_34, %c0_35, %c0_36] : memref<2x8x256xf32, #tpu.memory_space<vmem>>, vector<2x8x256xf32>
      tpu.vector_store %arg8[%c0_34, %c0_35, %c0_36], %48 {strides = array<i32>} : memref<2x8x256xf32, #tpu.memory_space<vmem>>, vector<2x8x256xf32>,
    } else {
    }
    %c0 = arith.constant 0 : index
    %c0_1 = arith.constant 0 : index
    %c0_2 = arith.constant 0 : index
    %3 = vector.load %arg8[%c0, %c0_1, %c0_2] : memref<2x8x256xf32, #tpu.memory_space<vmem>>, vector<2x8x256xf32>
    %cst = arith.constant dense<0.000000e+00> : vector<2x256xf32>
    %4 = vector.multi_reduction <add>, %3, %cst [1] : vector<2x8x256xf32> to vector<2x256xf32>
    %5 = vector.shape_cast %4 : vector<2x256xf32> to vector<2x1x256xf32>
    %cst_3 = arith.constant 8.000000e+00 : f32
    %6 = vector.broadcast %cst_3 : f32 to vector<2x1x256xf32>
    %7 = arith.divf %5, %6 : vector<2x1x256xf32>
    %8 = vector.broadcast %7 : vector<2x1x256xf32> to vector<2x8x256xf32>
    %9 = arith.subf %3, %8 : vector<2x8x256xf32>
    %10 = arith.mulf %9, %9 : vector<2x8x256xf32>
    %cst_4 = arith.constant dense<0.000000e+00> : vector<2x256xf32>
    %11 = vector.multi_reduction <add>, %10, %cst_4 [1] : vector<2x8x256xf32> to vector<2x256xf32>
    %12 = vector.shape_cast %11 : vector<2x256xf32> to vector<2x1x256xf32>
    %cst_5 = arith.constant 0.142857149 : f32
    %13 = vector.broadcast %cst_5 : f32 to vector<2x1x256xf32>
    %14 = arith.mulf %12, %13 : vector<2x1x256xf32>
    %c0_6 = arith.constant 0 : index
    %c0_7 = arith.constant 0 : index
    %c0_8 = arith.constant 0 : index
    %15 = vector.load %arg2[%c0_6, %c0_7, %c0_8] : memref<1x1x256xf32, #tpu.memory_space<vmem>>, vector<1x1x256xf32>
    %cst_9 = arith.constant 9.99999974E-6 : f32
    %16 = vector.broadcast %cst_9 : f32 to vector<2x1x256xf32>
    %17 = arith.addf %14, %16 : vector<2x1x256xf32>
    %18 = math.rsqrt %17 : vector<2x1x256xf32>
    %19 = vector.broadcast %18 : vector<2x1x256xf32> to vector<2x8x256xf32>
    %20 = arith.mulf %9, %19 : vector<2x8x256xf32>
    %21 = vector.broadcast %15 : vector<1x1x256xf32> to vector<2x8x256xf32>
    %22 = arith.mulf %21, %20 : vector<2x8x256xf32>
    %c0_10 = arith.constant 0 : index
    %c0_11 = arith.constant 0 : index
    %c0_12 = arith.constant 0 : index
    %23 = vector.load %arg3[%c0_10, %c0_11, %c0_12] : memref<1x1x256xf32, #tpu.memory_space<vmem>>, vector<1x1x256xf32>
    %24 = vector.broadcast %23 : vector<1x1x256xf32> to vector<2x8x256xf32>
    %25 = arith.addf %22, %24 : vector<2x8x256xf32>
    %26 = vector.shape_cast %25 : vector<2x8x256xf32> to vector<16x256xf32>
    %27 = arith.truncf %26 : vector<16x256xf32> to vector<16x256xbf16>
    %c0_13 = arith.constant 0 : index
    %c0_14 = arith.constant 0 : index
    %c0_15 = arith.constant 0 : index
    %28 = vector.load %arg4[%c0_13, %c0_14, %c0_15] : memref<1x256x1024xbf16, #tpu.memory_space<vmem>>, vector<1x256x1024xbf16>
    %29 = vector.shape_cast %28 : vector<1x256x1024xbf16> to vector<256x1024xbf16>
    %cst_16 = arith.constant dense<0.000000e+00> : vector<16x1024xf32>
    %30 = tpu.matmul %27, %29, %cst_16 {dimension_numbers = #tpu.dot_dimension_numbers<[1], [0], [0], [1], [0, 0, 1, 1], [], []>} : vector<16x256xbf16>, vector<256x1024xbf16>, vector<16x1024xf32> -> vector<16x1024xf32>
    %c0_17 = arith.constant 0 : index
    %c0_18 = arith.constant 0 : index
    %c0_19 = arith.constant 0 : index
    %31 = vector.load %arg5[%c0_17, %c0_18, %c0_19] : memref<1x1x1024xf32, #tpu.memory_space<vmem>>, vector<1x1x1024xf32>
    %32 = vector.shape_cast %31 : vector<1x1x1024xf32> to vector<1x1024xf32>
    %33 = vector.broadcast %32 : vector<1x1024xf32> to vector<16x1024xf32>
    %34 = arith.addf %30, %33 : vector<16x1024xf32>
    %cst_20 = arith.constant 0.000000e+00 : f32
    %35 = vector.broadcast %cst_20 : f32 to vector<16x1024xf32>
    %36 = arith.maximumf %34, %35 : vector<16x1024xf32>
    %37 = arith.truncf %36 : vector<16x1024xf32> to vector<16x1024xbf16>
    %c0_21 = arith.constant 0 : index
    %c0_22 = arith.constant 0 : index
    %c0_23 = arith.constant 0 : index
    %38 = vector.load %arg6[%c0_21, %c0_22, %c0_23] : memref<1x1024x256xbf16, #tpu.memory_space<vmem>>, vector<1x1024x256xbf16>
    %39 = vector.shape_cast %38 : vector<1x1024x256xbf16> to vector<1024x256xbf16>
    %cst_24 = arith.constant dense<0.000000e+00> : vector<16x256xf32>
    %40 = tpu.matmul %37, %39, %cst_24 {dimension_numbers = #tpu.dot_dimension_numbers<[1], [0], [0], [1], [0, 0, 1, 1], [], []>} : vector<16x1024xbf16>, vector<1024x256xbf16>, vector<16x256xf32> -> vector<16x256xf32>
    %c0_25 = arith.constant 0 : index
    %c0_26 = arith.constant 0 : index
    %c0_27 = arith.constant 0 : index
    %41 = vector.load %arg7[%c0_25, %c0_26, %c0_27] : memref<1x1x256xf32, #tpu.memory_space<vmem>>, vector<1x1x256xf32>
    %42 = vector.shape_cast %41 : vector<1x1x256xf32> to vector<1x256xf32>
    %43 = vector.broadcast %42 : vector<1x256xf32> to vector<16x256xf32>
    %44 = arith.addf %40, %43 : vector<16x256xf32>
    %45 = vector.shape_cast %44 : vector<16x256xf32> to vector<2x8x256xf32>
    %46 = arith.addf %45, %3 : vector<2x8x256xf32>
    %c0_28 = arith.constant 0 : index
    %c0_29 = arith.constant 0 : index
    %c0_30 = arith.constant 0 : index
    %47 = vector.load %arg8[%c0_28, %c0_29, %c0_30] : memref<2x8x256xf32, #tpu.memory_space<vmem>>, vector<2x8x256xf32>
    tpu.vector_store %arg8[%c0_28, %c0_29, %c0_30], %46 {strides = array<i32>} : memref<2x8x256xf32, #tpu.memory_space<vmem>>, vector<2x8x256xf32>,
    return
  }
  func.func @transform_0(%arg0: i32) -> (i32, i32, i32) {
    %c0_i32 = arith.constant 0 : i32
    %c0_i32_0 = arith.constant 0 : i32
    %c0_i32_1 = arith.constant 0 : i32
    %c0_i32_2 = arith.constant 0 : i32
    return %c0_i32, %c0_i32_0, %c0_i32_1 : i32, i32, i32
  }
  func.func @transform_1(%arg0: i32) -> (i32, i32, i32) {
    %c0_i32 = arith.constant 0 : i32
    %c0_i32_0 = arith.constant 0 : i32
    %c0_i32_1 = arith.constant 0 : i32
    return %arg0, %c0_i32, %c0_i32_0 : i32, i32, i32
  }
  func.func @transform_2(%arg0: i32) -> (i32, i32, i32) {
    %c0_i32 = arith.constant 0 : i32
    %c0_i32_0 = arith.constant 0 : i32
    %c0_i32_1 = arith.constant 0 : i32
    return %arg0, %c0_i32, %c0_i32_0 : i32, i32, i32
  }
  func.func @transform_3(%arg0: i32) -> (i32, i32, i32) {
    %c0_i32 = arith.constant 0 : i32
    %c0_i32_0 = arith.constant 0 : i32
    %c0_i32_1 = arith.constant 0 : i32
    return %arg0, %c0_i32, %c0_i32_0 : i32, i32, i32
  }
  func.func @transform_4(%arg0: i32) -> (i32, i32, i32) {
    %c0_i32 = arith.constant 0 : i32
    %c0_i32_0 = arith.constant 0 : i32
    %c0_i32_1 = arith.constant 0 : i32
    return %arg0, %c0_i32, %c0_i32_0 : i32, i32, i32
  }
  func.func @transform_5(%arg0: i32) -> (i32, i32, i32) {
    %c0_i32 = arith.constant 0 : i32
    %c0_i32_0 = arith.constant 0 : i32
    %c0_i32_1 = arith.constant 0 : i32
    return %arg0, %c0_i32, %c0_i32_0 : i32, i32, i32
  }
  func.func @transform_6(%arg0: i32) -> (i32, i32, i32) {
    %c0_i32 = arith.constant 0 : i32
    %c0_i32_0 = arith.constant 0 : i32
    %c0_i32_1 = arith.constant 0 : i32
    return %arg0, %c0_i32, %c0_i32_0 : i32, i32, i32
  }
  func.func @transform_7(%arg0: i32) -> (i32, i32, i32) {
    %c0_i32 = arith.constant 0 : i32
    %c0_i32_0 = arith.constant 0 : i32
    %c0_i32_1 = arith.constant 0 : i32
    %c0_i32_2 = arith.constant 0 : i32
    return %c0_i32, %c0_i32_0, %c0_i32_1 : i32, i32, i32
  }
}

</mosaic_0001>

<llo_original>
// kernel: tpu_custom_call.1
$region0: #{tpu_custom_call.1}
  #allocation0 [shape = 'u32[]', space=smem, size = 0x4, offset = 0x4, fixed_abs, tag = 'smem constant byte address 0x4 - core index']
  #allocation1 [shape = 'u32[144,128]{1,0:T(1,128)}', space=vmem, size = 0x12000, scoped, tag = 'internal scratch']
  %s0 = inlined_call_operand.hbm [shape: f32[2,8,256], index: 0, kind: input, shape index: {}]
  %s1 = inlined_call_operand.hbm [shape: f32[4,1,256], index: 1, kind: input, shape index: {}]
  %s2 = inlined_call_operand.hbm [shape: f32[4,1,256], index: 2, kind: input, shape index: {}]
  %s3 = inlined_call_operand.hbm [shape: bf16[4,256,1024], index: 3, kind: input, shape index: {}]
  %s4 = inlined_call_operand.hbm [shape: f32[4,1,1024], index: 4, kind: input, shape index: {}]
  %s5 = inlined_call_operand.hbm [shape: bf16[4,1024,256], index: 5, kind: input, shape index: {}]
  %s6 = inlined_call_operand.hbm [shape: f32[4,1,256], index: 6, kind: input, shape index: {}]
  %s7 = inlined_call_operand.hbm [shape: f32[2,8,256], index: 7, kind: output, shape index: {}]
  %s8 = sld [smem:[#allocation0]]
  $region93: #{tpu_custom_call.1} parent=0
    _
  %s10 = ssub.s32 1, %s8
  %s11 = scalar_select 0, %s10, %s8
  $region1: #{tpu_custom_call.1} parent=0
    #allocation2 [shape = 'u8[16384]{0}', space=vmem, size = 0x4000, scoped, tag = 'input window, operand 0, single buffered']
    #allocation3 [shape = 's32[2]{0}', space=sflag, size = 0x8, scoped, tag = 'scoped memory for tpu_custom_call.1']
    #allocation4 [shape = 's32[2]{0}', space=sflag, size = 0x8, scoped, tag = 'scoped memory for tpu_custom_call.1']
    #allocation5 [shape = 'u8[2048]{0}', space=vmem, size = 0x800, scoped, tag = 'input window, operand 1']
    #allocation6 [shape = 's32[2]{0}', space=sflag, size = 0x8, scoped, tag = 'scoped memory for tpu_custom_call.1']
    #allocation7 [shape = 'u8[2048]{0}', space=vmem, size = 0x800, scoped, tag = 'input window, operand 2']
    #allocation8 [shape = 'u8[1048576]{0}', space=vmem, size = 0x100000, scoped, tag = 'input window, operand 3']
    #allocation9 [shape = 's32[2]{0}', space=sflag, size = 0x8, scoped, tag = 'scoped memory for tpu_custom_call.1']
    #allocation10 [shape = 'u8[8192]{0}', space=vmem, size = 0x2000, scoped, tag = 'input window, operand 4']
    #allocation11 [shape = 'u8[1048576]{0}', space=vmem, size = 0x100000, scoped, tag = 'input window, operand 5']
    #allocation12 [shape = 's32[2]{0}', space=sflag, size = 0x8, scoped, tag = 'scoped memory for tpu_custom_call.1']
    #allocation13 [shape = 'u8[2048]{0}', space=vmem, size = 0x800, scoped, tag = 'input window, operand 6']
    #allocation14 [shape = 'u8[16384]{0}', space=vmem, size = 0x4000, scoped, tag = 'output window, operand 0, single buffered']
    %12 = vsyncpa [#allocation3], 0
    %13 = vsyncpa [#allocation6], 0
    %s14 = scalar_lea.sflag [#allocation6], 1
    %15 = vsyncpa %s14, 0
    %16 = vsyncpa [#allocation9], 0
    %s17 = scalar_lea.sflag [#allocation9], 1
    %18 = vsyncpa %s17, 0
    %19 = vsyncpa [#allocation12], 0
    %s20 = scalar_lea.sflag [#allocation12], 1
    %21 = vsyncpa %s20, 0
    %22 = vsyncpa [#allocation4], 0
    loop: start=0, step=1, limit=6
    $region2: #{tpu_custom_call.1} parent=1 // loop_pre_header
      _
    $region3: #{tpu_custom_call.1} parent=1 // loop_header
      %s24 = sphi 0, %s28
      %p25 = scmp.ge.s32.totalorder %s24, 6
      %s32 = sphi 0, %s32
      %s34 = sphi 0, %s32
      %s35 = sphi 0, %s34
      %s49 = sphi 0, %s35
      %s55 = sphi 0, %s57
      %s58 = sphi 0, %s55
      %s59 = sphi 0, %s58
      %s75 = sphi 0, %s59
      %s81 = sphi 0, %s83
      %s84 = sphi 0, %s81
      %s85 = sphi 0, %s84
      %s101 = sphi 0, %s85
      %s107 = sphi 0, %s109
      %s110 = sphi 0, %s107
      %s111 = sphi 0, %s110
      %s127 = sphi 0, %s111
      %s133 = sphi 0, %s135
      %s136 = sphi 0, %s133
      %s137 = sphi 0, %s136
      %s153 = sphi 0, %s137
      %s159 = sphi 0, %s161
      %s162 = sphi 0, %s159
      %s163 = sphi 0, %s162
      %s179 = sphi 0, %s163
      %s185 = sphi 0, %s187
      %s188 = sphi 0, %s185
      %s189 = sphi 0, %s188
      %s205 = sphi 0, %s189
      %s209 = sphi 0, %s209
      %s211 = sphi 0, %s209
      %s212 = sphi 0, %s211
      %s226 = sphi 0, %s212
    $region4: #{tpu_custom_call.1} parent=1 // loop_header_branch
      %27 = sbr.rel (%p25) target = $region8
    $region5: #{tpu_custom_call.1} parent=1 // loop_body
      %s29 = ssub.s32 %s24, 1
      %s30 = ssub.s32 %s24, 2
      %s31 = sadd.s32 %s24, 1
      %s33 = sadd.s32 %s32, 1
      %p36 = scmp.eq.s32.totalorder %s24, 3
      %p37 = scmp.ne.s32.totalorder %s32, %s34
      %p38 = scmp.eq.s32.totalorder %s24, 0
      %p39 = por %p37, %p38
      %p40 = scmp.ne.s32.totalorder %s32, %s34
      %p41 = scmp.eq.s32.totalorder %s29, 3
      %p42 = por %p40, %p41
      %p43 = scmp.ne.s32.totalorder %s34, %s35
      %p44 = scmp.eq.s32.totalorder %s29, 0
      %p45 = por %p43, %p44
      %p46 = scmp.ne.s32.totalorder %s34, %s35
      %p47 = scmp.eq.s32.totalorder %s30, 3
      %p48 = por %p46, %p47
      %p50 = scmp.ne.s32.totalorder %s35, %s49
      %p51 = scmp.eq.s32.totalorder %s30, 0
      %p52 = por %p50, %p51
      %s53 = ssub.s32 %s24, %s31
      %p54 = scmp.eq.s32.totalorder %s53, 0
      %s56 = sadd.s32 %s55, 1
      %s57 = scalar_select %p54, %s55, %s56
      %p60 = pneg %p54
      %p61 = scmp.eq.s32.totalorder %s24, 3
      %p62 = por %p60, %p61
      %p63 = scmp.ne.s32.totalorder %s55, %s58
      %p64 = scmp.eq.s32.totalorder %s24, 0
      %p65 = por %p63, %p64
      %p66 = scmp.ne.s32.totalorder %s55, %s58
      %p67 = scmp.eq.s32.totalorder %s29, 3
      %p68 = por %p66, %p67
      %p69 = scmp.ne.s32.totalorder %s58, %s59
      %p70 = scmp.eq.s32.totalorder %s29, 0
      %p71 = por %p69, %p70
      %p72 = scmp.ne.s32.totalorder %s58, %s59
      %p73 = scmp.eq.s32.totalorder %s30, 3
      %p74 = por %p72, %p73
      %p76 = scmp.ne.s32.totalorder %s59, %s75
      %p77 = scmp.eq.s32.totalorder %s30, 0
      %p78 = por %p76, %p77
      %s79 = ssub.s32 %s24, %s31
      %p80 = scmp.eq.s32.totalorder %s79, 0
      %s82 = sadd.s32 %s81, 1
      %s83 = scalar_select %p80, %s81, %s82
      %p86 = pneg %p80
      %p87 = scmp.eq.s32.totalorder %s24, 3
      %p88 = por %p86, %p87
      %p89 = scmp.ne.s32.totalorder %s81, %s84
      %p90 = scmp.eq.s32.totalorder %s24, 0
      %p91 = por %p89, %p90
      %p92 = scmp.ne.s32.totalorder %s81, %s84
      %p93 = scmp.eq.s32.totalorder %s29, 3
      %p94 = por %p92, %p93
      %p95 = scmp.ne.s32.totalorder %s84, %s85
      %p96 = scmp.eq.s32.totalorder %s29, 0
      %p97 = por %p95, %p96
      %p98 = scmp.ne.s32.totalorder %s84, %s85
      %p99 = scmp.eq.s32.totalorder %s30, 3
      %p100 = por %p98, %p99
      %p102 = scmp.ne.s32.totalorder %s85, %s101
      %p103 = scmp.eq.s32.totalorder %s30, 0
      %p104 = por %p102, %p103
      %s105 = ssub.s32 %s24, %s31
      %p106 = scmp.eq.s32.totalorder %s105, 0
      %s108 = sadd.s32 %s107, 1
      %s109 = scalar_select %p106, %s107, %s108
      %p112 = pneg %p106
      %p113 = scmp.eq.s32.totalorder %s24, 3
      %p114 = por %p112, %p113
      %p115 = scmp.ne.s32.totalorder %s107, %s110
      %p116 = scmp.eq.s32.totalorder %s24, 0
      %p117 = por %p115, %p116
      %p118 = scmp.ne.s32.totalorder %s107, %s110
      %p119 = scmp.eq.s32.totalorder %s29, 3
      %p120 = por %p118, %p119
      %p121 = scmp.ne.s32.totalorder %s110, %s111
      %p122 = scmp.eq.s32.totalorder %s29, 0
      %p123 = por %p121, %p122
      %p124 = scmp.ne.s32.totalorder %s110, %s111
      %p125 = scmp.eq.s32.totalorder %s30, 3
      %p126 = por %p124, %p125
      %p128 = scmp.ne.s32.totalorder %s111, %s127
      %p129 = scmp.eq.s32.totalorder %s30, 0
      %p130 = por %p128, %p129
      %s131 = ssub.s32 %s24, %s31
      %p132 = scmp.eq.s32.totalorder %s131, 0
      %s134 = sadd.s32 %s133, 1
      %s135 = scalar_select %p132, %s133, %s134
      %p138 = pneg %p132
      %p139 = scmp.eq.s32.totalorder %s24, 3
      %p140 = por %p138, %p139
      %p141 = scmp.ne.s32.totalorder %s133, %s136
      %p142 = scmp.eq.s32.totalorder %s24, 0
      %p143 = por %p141, %p142
      %p144 = scmp.ne.s32.totalorder %s133, %s136
      %p145 = scmp.eq.s32.totalorder %s29, 3
      %p146 = por %p144, %p145
      %p147 = scmp.ne.s32.totalorder %s136, %s137
      %p148 = scmp.eq.s32.totalorder %s29, 0
      %p149 = por %p147, %p148
      %p150 = scmp.ne.s32.totalorder %s136, %s137
      %p151 = scmp.eq.s32.totalorder %s30, 3
      %p152 = por %p150, %p151
      %p154 = scmp.ne.s32.totalorder %s137, %s153
      %p155 = scmp.eq.s32.totalorder %s30, 0
      %p156 = por %p154, %p155
      %s157 = ssub.s32 %s24, %s31
      %p158 = scmp.eq.s32.totalorder %s157, 0
      %s160 = sadd.s32 %s159, 1
      %s161 = scalar_select %p158, %s159, %s160
      %p164 = pneg %p158
      %p165 = scmp.eq.s32.totalorder %s24, 3
      %p166 = por %p164, %p165
      %p167 = scmp.ne.s32.totalorder %s159, %s162
      %p168 = scmp.eq.s32.totalorder %s24, 0
      %p169 = por %p167, %p168
      %p170 = scmp.ne.s32.totalorder %s159, %s162
      %p171 = scmp.eq.s32.totalorder %s29, 3
      %p172 = por %p170, %p171
      %p173 = scmp.ne.s32.totalorder %s162, %s163
      %p174 = scmp.eq.s32.totalorder %s29, 0
      %p175 = por %p173, %p174
      %p176 = scmp.ne.s32.totalorder %s162, %s163
      %p177 = scmp.eq.s32.totalorder %s30, 3
      %p178 = por %p176, %p177
      %p180 = scmp.ne.s32.totalorder %s163, %s179
      %p181 = scmp.eq.s32.totalorder %s30, 0
      %p182 = por %p180, %p181
      %s183 = ssub.s32 %s24, %s31
      %p184 = scmp.eq.s32.totalorder %s183, 0
      %s186 = sadd.s32 %s185, 1
      %s187 = scalar_select %p184, %s185, %s186
      %p190 = pneg %p184
      %p191 = scmp.eq.s32.totalorder %s24, 3
      %p192 = por %p190, %p191
      %p193 = scmp.ne.s32.totalorder %s185, %s188
      %p194 = scmp.eq.s32.totalorder %s24, 0
      %p195 = por %p193, %p194
      %p196 = scmp.ne.s32.totalorder %s185, %s188
      %p197 = scmp.eq.s32.totalorder %s29, 3
      %p198 = por %p196, %p197
      %p199 = scmp.ne.s32.totalorder %s188, %s189
      %p200 = scmp.eq.s32.totalorder %s29, 0
      %p201 = por %p199, %p200
      %p202 = scmp.ne.s32.totalorder %s188, %s189
      %p203 = scmp.eq.s32.totalorder %s30, 3
      %p204 = por %p202, %p203
      %p206 = scmp.ne.s32.totalorder %s189, %s205
      %p207 = scmp.eq.s32.totalorder %s30, 0
      %p208 = por %p206, %p207
      %s210 = sadd.s32 %s209, 1
      %p213 = scmp.eq.s32.totalorder %s24, 3
      %p214 = scmp.ne.s32.totalorder %s209, %s211
      %p215 = scmp.eq.s32.totalorder %s24, 0
      %p216 = por %p214, %p215
      %p217 = scmp.ne.s32.totalorder %s209, %s211
      %p218 = scmp.eq.s32.totalorder %s29, 3
      %p219 = por %p217, %p218
      %p220 = scmp.ne.s32.totalorder %s211, %s212
      %p221 = scmp.eq.s32.totalorder %s29, 0
      %p222 = por %p220, %p221
      %p223 = scmp.ne.s32.totalorder %s211, %s212
      %p224 = scmp.eq.s32.totalorder %s30, 3
      %p225 = por %p223, %p224
      %p227 = scmp.ne.s32.totalorder %s212, %s226
      %p228 = scmp.eq.s32.totalorder %s30, 0
      %p229 = por %p227, %p228
      %p230 = scmp.le.s32.totalorder 1, %s24
      %p231 = scmp.lt.s32.totalorder %s24, 5
      %p232 = pnand %p230, %p231
      %p233 = pneg %p232
      // Predicated region
      $region9: #{tpu_custom_call.1} parent=5 // pred_check
        _
      $region10: #{tpu_custom_call.1} parent=5 // pred_check_branch
        %235 = sbr.rel (%p232) target = $region12
      $region11: #{tpu_custom_call.1} parent=5 // pred_region
        %s236 = ssub.s32 %s24, 1
        // Predicated region
        $region13: #{tpu_custom_call.1} parent=11 // pred_check
          %p237 = pneg %p45
        $region14: #{tpu_custom_call.1} parent=11 // pred_check_branch
          %239 = sbr.rel (%p237) target = $region16
        $region15: #{tpu_custom_call.1} parent=11 // pred_region
          %s241 = ssub.s32 512, 512
          %242 = vsyncadd [#allocation3], %s241
          %s243 = sshll.u32 [#allocation2], 4
          %s244 = int_to_ptr.vmem [resolvable:$true] %s243
          %249 = dma.hbm_to_vmem [thread:$0]  %s0, 512, %s244, [#allocation3], 256, 256, 16
        $region16: #{tpu_custom_call.1} parent=11 // pred_fallthru
          _
      $region12: #{tpu_custom_call.1} parent=5 // pred_fallthru
        _
      %p250 = scmp.lt.s32.totalorder %s24, 4
      // Predicated region
      $region17: #{tpu_custom_call.1} parent=5 // pred_check
        %p251 = pneg %p250
      $region18: #{tpu_custom_call.1} parent=5 // pred_check_branch
        %253 = sbr.rel (%p251) target = $region20
      $region19: #{tpu_custom_call.1} parent=5 // pred_region
        // Predicated region
        $region21: #{tpu_custom_call.1} parent=19 // pred_check
          %p254 = pneg %p65
        $region22: #{tpu_custom_call.1} parent=19 // pred_check_branch
          %256 = sbr.rel (%p254) target = $region24
        $region23: #{tpu_custom_call.1} parent=19 // pred_region
          %s257 = sand.u32 %s24, 1
          %s258 = scalar_lea.sflag [#allocation6], %s257
          %s259 = sand.u32 %s55, 1
          %s260 = smul.addr %s259, 2
          %s261 = scalar_lea.vmem [#allocation5], %s260
          %s263 = ssub.s32 32, 32
          %264 = vsyncadd %s258, %s263
          %s265 = smul.addr %s24, 2
          %s266 = smul.addr %s265, 16
          %s267 = scalar_lea.hbm %s1, %s266
          %s269 = sshll.u32 %s261, 4
          %s270 = int_to_ptr.vmem [resolvable:$true] %s269
          %272 = dma.hbm_to_vmem [thread:$0]  %s267, 32, %s270, %s258
        $region24: #{tpu_custom_call.1} parent=19 // pred_fallthru
          _
        // Predicated region
        $region25: #{tpu_custom_call.1} parent=19 // pred_check
          %p273 = pneg %p91
        $region26: #{tpu_custom_call.1} parent=19 // pred_check_branch
          %275 = sbr.rel (%p273) target = $region28
        $region27: #{tpu_custom_call.1} parent=19 // pred_region
          %s276 = sand.u32 %s24, 1
          %s277 = scalar_lea.sflag [#allocation6], %s276
          %s278 = sand.u32 %s81, 1
          %s279 = smul.addr %s278, 2
          %s280 = scalar_lea.vmem [#allocation7], %s279
          %s282 = ssub.s32 32, 32
          %283 = vsyncadd %s277, %s282
          %s284 = smul.addr %s24, 2
          %s285 = smul.addr %s284, 16
          %s286 = scalar_lea.hbm %s2, %s285
          %s288 = sshll.u32 %s280, 4
          %s289 = int_to_ptr.vmem [resolvable:$true] %s288
          %291 = dma.hbm_to_vmem [thread:$0]  %s286, 32, %s289, %s277
        $region28: #{tpu_custom_call.1} parent=19 // pred_fallthru
          _
        // Predicated region
        $region29: #{tpu_custom_call.1} parent=19 // pred_check
          %p292 = pneg %p117
        $region30: #{tpu_custom_call.1} parent=19 // pred_check_branch
          %294 = sbr.rel (%p292) target = $region32
        $region31: #{tpu_custom_call.1} parent=19 // pred_region
          %s295 = sand.u32 %s24, 1
          %s296 = scalar_lea.sflag [#allocation9], %s295
          %s297 = sand.u32 %s107, 1
          %s298 = smul.addr %s297, 1024
          %s299 = scalar_lea.vmem [#allocation8], %s298
          %s301 = ssub.s32 16384, 16384
          %302 = vsyncadd %s296, %s301
          %s303 = smul.addr %s24, 256
          %s304 = smul.addr %s303, 64
          %s305 = scalar_lea.hbm %s3, %s304
          %s306 = sshll.u32 %s299, 4
          %s307 = int_to_ptr.vmem [resolvable:$true] %s306
          %312 = dma.hbm_to_vmem [thread:$0]  %s305, 16384, %s307, %s296, 512, 512, 32
        $region32: #{tpu_custom_call.1} parent=19 // pred_fallthru
          _
        // Predicated region
        $region33: #{tpu_custom_call.1} parent=19 // pred_check
          %p313 = pneg %p143
        $region34: #{tpu_custom_call.1} parent=19 // pred_check_branch
          %315 = sbr.rel (%p313) target = $region36
        $region35: #{tpu_custom_call.1} parent=19 // pred_region
          %s316 = sand.u32 %s24, 1
          %s317 = scalar_lea.sflag [#allocation9], %s316
          %s318 = sand.u32 %s133, 1
          %s319 = smul.addr %s318, 8
          %s320 = scalar_lea.vmem [#allocation10], %s319
          %s322 = ssub.s32 128, 128
          %323 = vsyncadd %s317, %s322
          %s324 = smul.addr %s24, 8
          %s325 = smul.addr %s324, 16
          %s326 = scalar_lea.hbm %s4, %s325
          %s328 = sshll.u32 %s320, 4
          %s329 = int_to_ptr.vmem [resolvable:$true] %s328
          %331 = dma.hbm_to_vmem [thread:$0]  %s326, 128, %s329, %s317
        $region36: #{tpu_custom_call.1} parent=19 // pred_fallthru
          _
        // Predicated region
        $region37: #{tpu_custom_call.1} parent=19 // pred_check
          %p332 = pneg %p169
        $region38: #{tpu_custom_call.1} parent=19 // pred_check_branch
          %334 = sbr.rel (%p332) target = $region40
        $region39: #{tpu_custom_call.1} parent=19 // pred_region
          %s335 = sand.u32 %s24, 1
          %s336 = scalar_lea.sflag [#allocation12], %s335
          %s337 = sand.u32 %s159, 1
          %s338 = smul.addr %s337, 1024
          %s339 = scalar_lea.vmem [#allocation11], %s338
          %s341 = ssub.s32 16384, 16384
          %342 = vsyncadd %s336, %s341
          %s343 = smul.addr %s24, 256
          %s344 = smul.addr %s343, 64
          %s345 = scalar_lea.hbm %s5, %s344
          %s346 = sshll.u32 %s339, 4
          %s347 = int_to_ptr.vmem [resolvable:$true] %s346
          %352 = dma.hbm_to_vmem [thread:$0]  %s345, 16384, %s347, %s336, 128, 128, 8
        $region40: #{tpu_custom_call.1} parent=19 // pred_fallthru
          _
        // Predicated region
        $region41: #{tpu_custom_call.1} parent=19 // pred_check
          %p353 = pneg %p195
        $region42: #{tpu_custom_call.1} parent=19 // pred_check_branch
          %355 = sbr.rel (%p353) target = $region44
        $region43: #{tpu_custom_call.1} parent=19 // pred_region
          %s356 = sand.u32 %s24, 1
          %s357 = scalar_lea.sflag [#allocation12], %s356
          %s358 = sand.u32 %s185, 1
          %s359 = smul.addr %s358, 2
          %s360 = scalar_lea.vmem [#allocation13], %s359
          %s362 = ssub.s32 32, 32
          %363 = vsyncadd %s357, %s362
          %s364 = smul.addr %s24, 2
          %s365 = smul.addr %s364, 16
          %s366 = scalar_lea.hbm %s6, %s365
          %s368 = sshll.u32 %s360, 4
          %s369 = int_to_ptr.vmem [resolvable:$true] %s368
          %371 = dma.hbm_to_vmem [thread:$0]  %s366, 32, %s369, %s357
        $region44: #{tpu_custom_call.1} parent=19 // pred_fallthru
          _
      $region20: #{tpu_custom_call.1} parent=5 // pred_fallthru
        _
      %p372 = scmp.le.s32.totalorder 1, %s24
      %p373 = scmp.lt.s32.totalorder %s24, 5
      %p374 = pnand %p372, %p373
      %p375 = pneg %p374
      // Predicated region
      $region45: #{tpu_custom_call.1} parent=5 // pred_check
        _
      $region46: #{tpu_custom_call.1} parent=5 // pred_check_branch
        %377 = sbr.rel (%p374) target = $region48
      $region47: #{tpu_custom_call.1} parent=5 // pred_region
        %s378 = ssub.s32 %s24, 1
        // Predicated region
        $region49: #{tpu_custom_call.1} parent=47 // pred_check
          %p379 = pneg %p45
        $region50: #{tpu_custom_call.1} parent=47 // pred_check_branch
          %381 = sbr.rel (%p379) target = $region52
        $region51: #{tpu_custom_call.1} parent=47 // pred_region
          %382 = dma.done [#allocation3], 512
        $region52: #{tpu_custom_call.1} parent=47 // pred_fallthru
          _
        %s383 = sand.u32 %s29, 1
        %s384 = scalar_lea.sflag [#allocation6], %s383
        %s385 = sand.u32 %s58, 1
        %s386 = smul.addr %s385, 2
        %s387 = scalar_lea.vmem [#allocation5], %s386
        // Predicated region
        $region53: #{tpu_custom_call.1} parent=47 // pred_check
          %p388 = pneg %p71
        $region54: #{tpu_custom_call.1} parent=47 // pred_check_branch
          %390 = sbr.rel (%p388) target = $region56
        $region55: #{tpu_custom_call.1} parent=47 // pred_region
          %391 = dma.done %s384, 32
        $region56: #{tpu_custom_call.1} parent=47 // pred_fallthru
          _
        %s392 = sand.u32 %s29, 1
        %s393 = scalar_lea.sflag [#allocation6], %s392
        %s394 = sand.u32 %s84, 1
        %s395 = smul.addr %s394, 2
        %s396 = scalar_lea.vmem [#allocation7], %s395
        // Predicated region
        $region57: #{tpu_custom_call.1} parent=47 // pred_check
          %p397 = pneg %p97
        $region58: #{tpu_custom_call.1} parent=47 // pred_check_branch
          %399 = sbr.rel (%p397) target = $region60
        $region59: #{tpu_custom_call.1} parent=47 // pred_region
          %400 = dma.done %s393, 32
        $region60: #{tpu_custom_call.1} parent=47 // pred_fallthru
          _
        %s401 = sand.u32 %s29, 1
        %s402 = scalar_lea.sflag [#allocation9], %s401
        %s403 = sand.u32 %s110, 1
        %s404 = smul.addr %s403, 1024
        %s405 = scalar_lea.vmem [#allocation8], %s404
        // Predicated region
        $region61: #{tpu_custom_call.1} parent=47 // pred_check
          %p406 = pneg %p123
        $region62: #{tpu_custom_call.1} parent=47 // pred_check_branch
          %408 = sbr.rel (%p406) target = $region64
        $region63: #{tpu_custom_call.1} parent=47 // pred_region
          %409 = dma.done %s402, 16384
        $region64: #{tpu_custom_call.1} parent=47 // pred_fallthru
          _
        %s410 = sand.u32 %s29, 1
        %s411 = scalar_lea.sflag [#allocation9], %s410
        %s412 = sand.u32 %s136, 1
        %s413 = smul.addr %s412, 8
        %s414 = scalar_lea.vmem [#allocation10], %s413
        // Predicated region
        $region65: #{tpu_custom_call.1} parent=47 // pred_check
          %p415 = pneg %p149
        $region66: #{tpu_custom_call.1} parent=47 // pred_check_branch
          %417 = sbr.rel (%p415) target = $region68
        $region67: #{tpu_custom_call.1} parent=47 // pred_region
          %418 = dma.done %s411, 128
        $region68: #{tpu_custom_call.1} parent=47 // pred_fallthru
          _
        %s419 = sand.u32 %s29, 1
        %s420 = scalar_lea.sflag [#allocation12], %s419
        %s421 = sand.u32 %s162, 1
        %s422 = smul.addr %s421, 1024
        %s423 = scalar_lea.vmem [#allocation11], %s422
        // Predicated region
        $region69: #{tpu_custom_call.1} parent=47 // pred_check
          %p424 = pneg %p175
        $region70: #{tpu_custom_call.1} parent=47 // pred_check_branch
          %426 = sbr.rel (%p424) target = $region72
        $region71: #{tpu_custom_call.1} parent=47 // pred_region
          %427 = dma.done %s420, 16384
        $region72: #{tpu_custom_call.1} parent=47 // pred_fallthru
          _
        %s428 = sand.u32 %s29, 1
        %s429 = scalar_lea.sflag [#allocation12], %s428
        %s430 = sand.u32 %s188, 1
        %s431 = smul.addr %s430, 2
        %s432 = scalar_lea.vmem [#allocation13], %s431
        // Predicated region
        $region73: #{tpu_custom_call.1} parent=47 // pred_check
          %p433 = pneg %p201
        $region74: #{tpu_custom_call.1} parent=47 // pred_check_branch
          %435 = sbr.rel (%p433) target = $region76
        $region75: #{tpu_custom_call.1} parent=47 // pred_region
          %436 = dma.done %s429, 32
        $region76: #{tpu_custom_call.1} parent=47 // pred_fallthru
          _
        %p437 = pneg %p45
        %p438 = pneg %p42
        %s439 = sand.u32 %s29, 1
        %s440 = scalar_lea.sflag [#allocation6], %s439
        %s441 = sand.u32 %s58, 1
        %s442 = smul.addr %s441, 2
        %s443 = scalar_lea.vmem [#allocation5], %s442
        %p444 = pneg %p71
        %p445 = pneg %p68
        %s446 = sand.u32 %s29, 1
        %s447 = scalar_lea.sflag [#allocation6], %s446
        %s448 = sand.u32 %s84, 1
        %s449 = smul.addr %s448, 2
        %s450 = scalar_lea.vmem [#allocation7], %s449
        %p451 = pneg %p97
        %p452 = pneg %p94
        %s453 = sand.u32 %s29, 1
        %s454 = scalar_lea.sflag [#allocation9], %s453
        %s455 = sand.u32 %s110, 1
        %s456 = smul.addr %s455, 1024
        %s457 = scalar_lea.vmem [#allocation8], %s456
        %p458 = pneg %p123
        %p459 = pneg %p120
        %s460 = sand.u32 %s29, 1
        %s461 = scalar_lea.sflag [#allocation9], %s460
        %s462 = sand.u32 %s136, 1
        %s463 = smul.addr %s462, 8
        %s464 = scalar_lea.vmem [#allocation10], %s463
        %p465 = pneg %p149
        %p466 = pneg %p146
        %s467 = sand.u32 %s29, 1
        %s468 = scalar_lea.sflag [#allocation12], %s467
        %s469 = sand.u32 %s162, 1
        %s470 = smul.addr %s469, 1024
        %s471 = scalar_lea.vmem [#allocation11], %s470
        %p472 = pneg %p175
        %p473 = pneg %p172
        %s474 = sand.u32 %s29, 1
        %s475 = scalar_lea.sflag [#allocation12], %s474
        %s476 = sand.u32 %s188, 1
        %s477 = smul.addr %s476, 2
        %s478 = scalar_lea.vmem [#allocation13], %s477
        %p479 = pneg %p201
        %p480 = pneg %p198
        %p481 = pneg %p222
        %p482 = pneg %p219
        %p483 = scmp.eq.s32.totalorder %s29, 0
        // Predicated region
        $region77: #{tpu_custom_call.1} parent=47 // pred_check
          %p484 = pneg %p483
        $region78: #{tpu_custom_call.1} parent=47 // pred_check_branch
          %486 = sbr.rel (%p484) target = $region80
        $region79: #{tpu_custom_call.1} parent=47 // pred_region
          %v487 = vld [vmem:[#allocation2] sm:$0xff]
          %v488 = vld [vmem:[#allocation2 + $0x8] sm:$0xff]
          %v489 = vld [vmem:[#allocation2 + $0x10] sm:$0xff]
          %v490 = vld [vmem:[#allocation2 + $0x18] sm:$0xff]
          %491 = vst [vmem:[#allocation14] sm:$0xff] %v487
          %492 = vst [vmem:[#allocation14 + $0x8] sm:$0xff] %v488
          %493 = vst [vmem:[#allocation14 + $0x10] sm:$0xff] %v489
          %494 = vst [vmem:[#allocation14 + $0x18] sm:$0xff] %v490
        $region80: #{tpu_custom_call.1} parent=47 // pred_fallthru
          _
        %v495 = vld [vmem:[#allocation14] sm:$0xff]
        %v496 = vld [vmem:[#allocation14 + $0x8] sm:$0xff]
        %v497 = vld [vmem:[#allocation14 + $0x10] sm:$0xff]
        %v498 = vld [vmem:[#allocation14 + $0x18] sm:$0xff]
        %v499 = vrot.slane %v495, 4
        %v500 = vadd.f32 %v495, %v499
        %v501 = vrot.slane %v500, 2
        %v502 = vadd.f32 %v500, %v501
        %v503 = vrot.slane %v502, 1
        %v504 = vadd.f32 %v502, %v503
        %v505 = vrot.slane %v496, 4
        %v506 = vadd.f32 %v496, %v505
        %v507 = vrot.slane %v506, 2
        %v508 = vadd.f32 %v506, %v507
        %v509 = vrot.slane %v508, 1
        %v510 = vadd.f32 %v508, %v509
        %v511 = vrot.slane %v497, 4
        %v512 = vadd.f32 %v497, %v511
        %v513 = vrot.slane %v512, 2
        %v514 = vadd.f32 %v512, %v513
        %v515 = vrot.slane %v514, 1
        %v516 = vadd.f32 %v514, %v515
        %v517 = vrot.slane %v498, 4
        %v518 = vadd.f32 %v498, %v517
        %v519 = vrot.slane %v518, 2
        %v520 = vadd.f32 %v518, %v519
        %v521 = vrot.slane %v520, 1
        %v522 = vadd.f32 %v520, %v521
        %v523 = vrcp.pop 8.0
        %v524 = vmul.f32 %v504, %v523
        %v525 = vmul.f32 %v510, %v523
        %v526 = vmul.f32 %v516, %v523
        %v527 = vmul.f32 %v522, %v523
        %v528 = vsub.f32 %v495, %v524
        %v529 = vsub.f32 %v496, %v525
        %v530 = vsub.f32 %v497, %v526
        %v531 = vsub.f32 %v498, %v527
        %v532 = vmul.f32 %v528, %v528
        %v533 = vmul.f32 %v529, %v529
        %v534 = vmul.f32 %v530, %v530
        %v535 = vmul.f32 %v531, %v531
        %v536 = vrot.slane %v532, 4
        %v537 = vadd.f32 %v532, %v536
        %v538 = vrot.slane %v537, 2
        %v539 = vadd.f32 %v537, %v538
        %v540 = vrot.slane %v539, 1
        %v541 = vadd.f32 %v539, %v540
        %v542 = vrot.slane %v533, 4
        %v543 = vadd.f32 %v533, %v542
        %v544 = vrot.slane %v543, 2
        %v545 = vadd.f32 %v543, %v544
        %v546 = vrot.slane %v545, 1
        %v547 = vadd.f32 %v545, %v546
        %v548 = vrot.slane %v534, 4
        %v549 = vadd.f32 %v534, %v548
        %v550 = vrot.slane %v549, 2
        %v551 = vadd.f32 %v549, %v550
        %v552 = vrot.slane %v551, 1
        %v553 = vadd.f32 %v551, %v552
        %v554 = vrot.slane %v535, 4
        %v555 = vadd.f32 %v535, %v554
        %v556 = vrot.slane %v555, 2
        %v557 = vadd.f32 %v555, %v556
        %v558 = vrot.slane %v557, 1
        %v559 = vadd.f32 %v557, %v558
        %v560 = vmul.f32 %v541, 0.14285715
        %v561 = vmul.f32 %v547, 0.14285715
        %v562 = vmul.f32 %v553, 0.14285715
        %v563 = vmul.f32 %v559, 0.14285715
        %v564 = vld [vmem:[%s387] sm:$0x3]
        %v565 = vadd.f32 %v560, 1e-05
        %v566 = vadd.f32 %v561, 1e-05
        %v567 = vadd.f32 %v562, 1e-05
        %v568 = vadd.f32 %v563, 1e-05
        %v569 = vrsqrt.pop %v565
        %v570 = vrsqrt.pop %v566
        %v571 = vrsqrt.pop %v567
        %v572 = vrsqrt.pop %v568
        %v573 = vmul.f32 %v528, %v569
        %v574 = vmul.f32 %v529, %v570
        %v575 = vmul.f32 %v530, %v571
        %v576 = vmul.f32 %v531, %v572
        %v578 = vlaneseq
        %v579 = vshrl.u32 %v578, 7
        %v580 = vsub.s32 0, %v579
        %v581 = vrot.slane %v564, %v580
        %v582 = vlaneseq
        %v583 = vshrl.u32 %v582, 7
        %v584 = vsub.s32 1, %v583
        %v585 = vrot.slane %v564, %v584
        %v588 = vmul.f32 %v581, %v573
        %v589 = vmul.f32 %v585, %v574
        %v590 = vmul.f32 %v581, %v575
        %v591 = vmul.f32 %v585, %v576
        %v592 = vld [vmem:[%s396] sm:$0x3]
        %v594 = vlaneseq
        %v595 = vshrl.u32 %v594, 7
        %v596 = vsub.s32 0, %v595
        %v597 = vrot.slane %v592, %v596
        %v598 = vlaneseq
        %v599 = vshrl.u32 %v598, 7
        %v600 = vsub.s32 1, %v599
        %v601 = vrot.slane %v592, %v600
        %v604 = vadd.f32 %v588, %v597
        %v605 = vadd.f32 %v589, %v601
        %v606 = vadd.f32 %v590, %v597
        %v607 = vadd.f32 %v591, %v601
        %v608 = vpack.c.bf16 %v606, %v604
        %v609 = vpack.c.bf16 %v607, %v605
        %v610 = vld [vmem:[%s405] sm:$0xff]
        %v611 = vld [vmem:[%s405 + $0x8] sm:$0xff]
        %v612 = vld [vmem:[%s405 + $0x10] sm:$0xff]
        %v613 = vld [vmem:[%s405 + $0x18] sm:$0xff]
        %v614 = vld [vmem:[%s405 + $0x20] sm:$0xff]
        %v615 = vld [vmem:[%s405 + $0x28] sm:$0xff]
        %v616 = vld [vmem:[%s405 + $0x30] sm:$0xff]
        %v617 = vld [vmem:[%s405 + $0x38] sm:$0xff]
        %v618 = vld [vmem:[%s405 + $0x40] sm:$0xff]
        %v619 = vld [vmem:[%s405 + $0x48] sm:$0xff]
        %v620 = vld [vmem:[%s405 + $0x50] sm:$0xff]
        %v621 = vld [vmem:[%s405 + $0x58] sm:$0xff]
        %v622 = vld [vmem:[%s405 + $0x60] sm:$0xff]
        %v623 = vld [vmem:[%s405 + $0x68] sm:$0xff]
        %v624 = vld [vmem:[%s405 + $0x70] sm:$0xff]
        %v625 = vld [vmem:[%s405 + $0x78] sm:$0xff]
        %v626 = vld [vmem:[%s405 + $0x80] sm:$0xff]
        %v627 = vld [vmem:[%s405 + $0x88] sm:$0xff]
        %v628 = vld [vmem:[%s405 + $0x90] sm:$0xff]
        %v629 = vld [vmem:[%s405 + $0x98] sm:$0xff]
        %v630 = vld [vmem:[%s405 + $0xa0] sm:$0xff]
        %v631 = vld [vmem:[%s405 + $0xa8] sm:$0xff]
        %v632 = vld [vmem:[%s405 + $0xb0] sm:$0xff]
        %v633 = vld [vmem:[%s405 + $0xb8] sm:$0xff]
        %v634 = vld [vmem:[%s405 + $0xc0] sm:$0xff]
        %v635 = vld [vmem:[%s405 + $0xc8] sm:$0xff]
        %v636 = vld [vmem:[%s405 + $0xd0] sm:$0xff]
        %v637 = vld [vmem:[%s405 + $0xd8] sm:$0xff]
        %v638 = vld [vmem:[%s405 + $0xe0] sm:$0xff]
        %v639 = vld [vmem:[%s405 + $0xe8] sm:$0xff]
        %v640 = vld [vmem:[%s405 + $0xf0] sm:$0xff]
        %v641 = vld [vmem:[%s405 + $0xf8] sm:$0xff]
        %v642 = vld [vmem:[%s405 + $0x100] sm:$0xff]
        %v643 = vld [vmem:[%s405 + $0x108] sm:$0xff]
        %v644 = vld [vmem:[%s405 + $0x110] sm:$0xff]
        %v645 = vld [vmem:[%s405 + $0x118] sm:$0xff]
        %v646 = vld [vmem:[%s405 + $0x120] sm:$0xff]
        %v647 = vld [vmem:[%s405 + $0x128] sm:$0xff]
        %v648 = vld [vmem:[%s405 + $0x130] sm:$0xff]
        %v649 = vld [vmem:[%s405 + $0x138] sm:$0xff]
        %v650 = vld [vmem:[%s405 + $0x140] sm:$0xff]
        %v651 = vld [vmem:[%s405 + $0x148] sm:$0xff]
        %v652 = vld [vmem:[%s405 + $0x150] sm:$0xff]
        %v653 = vld [vmem:[%s405 + $0x158] sm:$0xff]
        %v654 = vld [vmem:[%s405 + $0x160] sm:$0xff]
        %v655 = vld [vmem:[%s405 + $0x168] sm:$0xff]
        %v656 = vld [vmem:[%s405 + $0x170] sm:$0xff]
        %v657 = vld [vmem:[%s405 + $0x178] sm:$0xff]
        %v658 = vld [vmem:[%s405 + $0x180] sm:$0xff]
        %v659 = vld [vmem:[%s405 + $0x188] sm:$0xff]
        %v660 = vld [vmem:[%s405 + $0x190] sm:$0xff]
        %v661 = vld [vmem:[%s405 + $0x198] sm:$0xff]
        %v662 = vld [vmem:[%s405 + $0x1a0] sm:$0xff]
        %v663 = vld [vmem:[%s405 + $0x1a8] sm:$0xff]
        %v664 = vld [vmem:[%s405 + $0x1b0] sm:$0xff]
        %v665 = vld [vmem:[%s405 + $0x1b8] sm:$0xff]
        %v666 = vld [vmem:[%s405 + $0x1c0] sm:$0xff]
        %v667 = vld [vmem:[%s405 + $0x1c8] sm:$0xff]
        %v668 = vld [vmem:[%s405 + $0x1d0] sm:$0xff]
        %v669 = vld [vmem:[%s405 + $0x1d8] sm:$0xff]
        %v670 = vld [vmem:[%s405 + $0x1e0] sm:$0xff]
        %v671 = vld [vmem:[%s405 + $0x1e8] sm:$0xff]
        %v672 = vld [vmem:[%s405 + $0x1f0] sm:$0xff]
        %v673 = vld [vmem:[%s405 + $0x1f8] sm:$0xff]
        %v674 = vld [vmem:[%s405 + $0x200] sm:$0xff]
        %v675 = vld [vmem:[%s405 + $0x208] sm:$0xff]
        %v676 = vld [vmem:[%s405 + $0x210] sm:$0xff]
        %v677 = vld [vmem:[%s405 + $0x218] sm:$0xff]
        %v678 = vld [vmem:[%s405 + $0x220] sm:$0xff]
        %v679 = vld [vmem:[%s405 + $0x228] sm:$0xff]
        %v680 = vld [vmem:[%s405 + $0x230] sm:$0xff]
        %v681 = vld [vmem:[%s405 + $0x238] sm:$0xff]
        %v682 = vld [vmem:[%s405 + $0x240] sm:$0xff]
        %v683 = vld [vmem:[%s405 + $0x248] sm:$0xff]
        %v684 = vld [vmem:[%s405 + $0x250] sm:$0xff]
        %v685 = vld [vmem:[%s405 + $0x258] sm:$0xff]
        %v686 = vld [vmem:[%s405 + $0x260] sm:$0xff]
        %v687 = vld [vmem:[%s405 + $0x268] sm:$0xff]
        %v688 = vld [vmem:[%s405 + $0x270] sm:$0xff]
        %v689 = vld [vmem:[%s405 + $0x278] sm:$0xff]
        %v690 = vld [vmem:[%s405 + $0x280] sm:$0xff]
        %v691 = vld [vmem:[%s405 + $0x288] sm:$0xff]
        %v692 = vld [vmem:[%s405 + $0x290] sm:$0xff]
        %v693 = vld [vmem:[%s405 + $0x298] sm:$0xff]
        %v694 = vld [vmem:[%s405 + $0x2a0] sm:$0xff]
        %v695 = vld [vmem:[%s405 + $0x2a8] sm:$0xff]
        %v696 = vld [vmem:[%s405 + $0x2b0] sm:$0xff]
        %v697 = vld [vmem:[%s405 + $0x2b8] sm:$0xff]
        %v698 = vld [vmem:[%s405 + $0x2c0] sm:$0xff]
        %v699 = vld [vmem:[%s405 + $0x2c8] sm:$0xff]
        %v700 = vld [vmem:[%s405 + $0x2d0] sm:$0xff]
        %v701 = vld [vmem:[%s405 + $0x2d8] sm:$0xff]
        %v702 = vld [vmem:[%s405 + $0x2e0] sm:$0xff]
        %v703 = vld [vmem:[%s405 + $0x2e8] sm:$0xff]
        %v704 = vld [vmem:[%s405 + $0x2f0] sm:$0xff]
        %v705 = vld [vmem:[%s405 + $0x2f8] sm:$0xff]
        %v706 = vld [vmem:[%s405 + $0x300] sm:$0xff]
        %v707 = vld [vmem:[%s405 + $0x308] sm:$0xff]
        %v708 = vld [vmem:[%s405 + $0x310] sm:$0xff]
        %v709 = vld [vmem:[%s405 + $0x318] sm:$0xff]
        %v710 = vld [vmem:[%s405 + $0x320] sm:$0xff]
        %v711 = vld [vmem:[%s405 + $0x328] sm:$0xff]
        %v712 = vld [vmem:[%s405 + $0x330] sm:$0xff]
        %v713 = vld [vmem:[%s405 + $0x338] sm:$0xff]
        %v714 = vld [vmem:[%s405 + $0x340] sm:$0xff]
        %v715 = vld [vmem:[%s405 + $0x348] sm:$0xff]
        %v716 = vld [vmem:[%s405 + $0x350] sm:$0xff]
        %v717 = vld [vmem:[%s405 + $0x358] sm:$0xff]
        %v718 = vld [vmem:[%s405 + $0x360] sm:$0xff]
        %v719 = vld [vmem:[%s405 + $0x368] sm:$0xff]
        %v720 = vld [vmem:[%s405 + $0x370] sm:$0xff]
        %v721 = vld [vmem:[%s405 + $0x378] sm:$0xff]
        %v722 = vld [vmem:[%s405 + $0x380] sm:$0xff]
        %v723 = vld [vmem:[%s405 + $0x388] sm:$0xff]
        %v724 = vld [vmem:[%s405 + $0x390] sm:$0xff]
        %v725 = vld [vmem:[%s405 + $0x398] sm:$0xff]
        %v726 = vld [vmem:[%s405 + $0x3a0] sm:$0xff]
        %v727 = vld [vmem:[%s405 + $0x3a8] sm:$0xff]
        %v728 = vld [vmem:[%s405 + $0x3b0] sm:$0xff]
        %v729 = vld [vmem:[%s405 + $0x3b8] sm:$0xff]
        %v730 = vld [vmem:[%s405 + $0x3c0] sm:$0xff]
        %v731 = vld [vmem:[%s405 + $0x3c8] sm:$0xff]
        %v732 = vld [vmem:[%s405 + $0x3d0] sm:$0xff]
        %v733 = vld [vmem:[%s405 + $0x3d8] sm:$0xff]
        %v734 = vld [vmem:[%s405 + $0x3e0] sm:$0xff]
        %v735 = vld [vmem:[%s405 + $0x3e8] sm:$0xff]
        %v736 = vld [vmem:[%s405 + $0x3f0] sm:$0xff]
        %v737 = vld [vmem:[%s405 + $0x3f8] sm:$0xff]
        %v738 = vld [vmem:[%s414] sm:$0xff]
        %v740 = vlaneseq
        %v741 = vshrl.u32 %v740, 7
        %v742 = vsub.s32 0, %v741
        %v743 = vrot.slane %v738, %v742
        %v744 = vlaneseq
        %v745 = vshrl.u32 %v744, 7
        %v746 = vsub.s32 1, %v745
        %v747 = vrot.slane %v738, %v746
        %v748 = vlaneseq
        %v749 = vshrl.u32 %v748, 7
        %v750 = vsub.s32 2, %v749
        %v751 = vrot.slane %v738, %v750
        %v752 = vlaneseq
        %v753 = vshrl.u32 %v752, 7
        %v754 = vsub.s32 3, %v753
        %v755 = vrot.slane %v738, %v754
        %v756 = vlaneseq
        %v757 = vshrl.u32 %v756, 7
        %v758 = vsub.s32 4, %v757
        %v759 = vrot.slane %v738, %v758
        %v760 = vlaneseq
        %v761 = vshrl.u32 %v760, 7
        %v762 = vsub.s32 5, %v761
        %v763 = vrot.slane %v738, %v762
        %v764 = vlaneseq
        %v765 = vshrl.u32 %v764, 7
        %v766 = vsub.s32 6, %v765
        %v767 = vrot.slane %v738, %v766
        %v768 = vlaneseq
        %v769 = vshrl.u32 %v768, 7
        %v770 = vsub.s32 7, %v769
        %v771 = vrot.slane %v738, %v770
        %v908 = vunpack.c.l.b16 %v610
        %v909 = vunpack.c.h.b16 %v610
        %v910 = vunpack.c.l.b16 %v611
        %v911 = vunpack.c.h.b16 %v611
        %v912 = vunpack.c.l.b16 %v612
        %v913 = vunpack.c.h.b16 %v612
        %v914 = vunpack.c.l.b16 %v613
        %v915 = vunpack.c.h.b16 %v613
        %v916 = vunpack.c.l.b16 %v614
        %v917 = vunpack.c.h.b16 %v614
        %v918 = vunpack.c.l.b16 %v615
        %v919 = vunpack.c.h.b16 %v615
        %v920 = vunpack.c.l.b16 %v616
        %v921 = vunpack.c.h.b16 %v616
        %v922 = vunpack.c.l.b16 %v617
        %v923 = vunpack.c.h.b16 %v617
        %v924 = vunpack.c.l.b16 %v618
        %v925 = vunpack.c.h.b16 %v618
        %v926 = vunpack.c.l.b16 %v619
        %v927 = vunpack.c.h.b16 %v619
        %v928 = vunpack.c.l.b16 %v620
        %v929 = vunpack.c.h.b16 %v620
        %v930 = vunpack.c.l.b16 %v621
        %v931 = vunpack.c.h.b16 %v621
        %v932 = vunpack.c.l.b16 %v622
        %v933 = vunpack.c.h.b16 %v622
        %v934 = vunpack.c.l.b16 %v623
        %v935 = vunpack.c.h.b16 %v623
        %v936 = vunpack.c.l.b16 %v624
        %v937 = vunpack.c.h.b16 %v624
        %v938 = vunpack.c.l.b16 %v625
        %v939 = vunpack.c.h.b16 %v625
        %v940 = vunpack.c.l.b16 %v626
        %v941 = vunpack.c.h.b16 %v626
        %v942 = vunpack.c.l.b16 %v627
        %v943 = vunpack.c.h.b16 %v627
        %v944 = vunpack.c.l.b16 %v628
        %v945 = vunpack.c.h.b16 %v628
        %v946 = vunpack.c.l.b16 %v629
        %v947 = vunpack.c.h.b16 %v629
        %v948 = vunpack.c.l.b16 %v630
        %v949 = vunpack.c.h.b16 %v630
        %v950 = vunpack.c.l.b16 %v631
        %v951 = vunpack.c.h.b16 %v631
        %v952 = vunpack.c.l.b16 %v632
        %v953 = vunpack.c.h.b16 %v632
        %v954 = vunpack.c.l.b16 %v633
        %v955 = vunpack.c.h.b16 %v633
        %v956 = vunpack.c.l.b16 %v634
        %v957 = vunpack.c.h.b16 %v634
        %v958 = vunpack.c.l.b16 %v635
        %v959 = vunpack.c.h.b16 %v635
        %v960 = vunpack.c.l.b16 %v636
        %v961 = vunpack.c.h.b16 %v636
        %v962 = vunpack.c.l.b16 %v637
        %v963 = vunpack.c.h.b16 %v637
        %v964 = vunpack.c.l.b16 %v638
        %v965 = vunpack.c.h.b16 %v638
        %v966 = vunpack.c.l.b16 %v639
        %v967 = vunpack.c.h.b16 %v639
        %v968 = vunpack.c.l.b16 %v640
        %v969 = vunpack.c.h.b16 %v640
        %v970 = vunpack.c.l.b16 %v641
        %v971 = vunpack.c.h.b16 %v641
        %v972 = vunpack.c.l.b16 %v642
        %v973 = vunpack.c.h.b16 %v642
        %v974 = vunpack.c.l.b16 %v643
        %v975 = vunpack.c.h.b16 %v643
        %v976 = vunpack.c.l.b16 %v644
        %v977 = vunpack.c.h.b16 %v644
        %v978 = vunpack.c.l.b16 %v645
        %v979 = vunpack.c.h.b16 %v645
        %v980 = vunpack.c.l.b16 %v646
        %v981 = vunpack.c.h.b16 %v646
        %v982 = vunpack.c.l.b16 %v647
        %v983 = vunpack.c.h.b16 %v647
        %v984 = vunpack.c.l.b16 %v648
        %v985 = vunpack.c.h.b16 %v648
        %v986 = vunpack.c.l.b16 %v649
        %v987 = vunpack.c.h.b16 %v649
        %v988 = vunpack.c.l.b16 %v650
        %v989 = vunpack.c.h.b16 %v650
        %v990 = vunpack.c.l.b16 %v651
        %v991 = vunpack.c.h.b16 %v651
        %v992 = vunpack.c.l.b16 %v652
        %v993 = vunpack.c.h.b16 %v652
        %v994 = vunpack.c.l.b16 %v653
        %v995 = vunpack.c.h.b16 %v653
        %v996 = vunpack.c.l.b16 %v654
        %v997 = vunpack.c.h.b16 %v654
        %v998 = vunpack.c.l.b16 %v655
        %v999 = vunpack.c.h.b16 %v655
        %v1000 = vunpack.c.l.b16 %v656
        %v1001 = vunpack.c.h.b16 %v656
        %v1002 = vunpack.c.l.b16 %v657
        %v1003 = vunpack.c.h.b16 %v657
        %v1004 = vunpack.c.l.b16 %v658
        %v1005 = vunpack.c.h.b16 %v658
        %v1006 = vunpack.c.l.b16 %v659
        %v1007 = vunpack.c.h.b16 %v659
        %v1008 = vunpack.c.l.b16 %v660
        %v1009 = vunpack.c.h.b16 %v660
        %v1010 = vunpack.c.l.b16 %v661
        %v1011 = vunpack.c.h.b16 %v661
        %v1012 = vunpack.c.l.b16 %v662
        %v1013 = vunpack.c.h.b16 %v662
        %v1014 = vunpack.c.l.b16 %v663
        %v1015 = vunpack.c.h.b16 %v663
        %v1016 = vunpack.c.l.b16 %v664
        %v1017 = vunpack.c.h.b16 %v664
        %v1018 = vunpack.c.l.b16 %v665
        %v1019 = vunpack.c.h.b16 %v665
        %v1020 = vunpack.c.l.b16 %v666
        %v1021 = vunpack.c.h.b16 %v666
        %v1022 = vunpack.c.l.b16 %v667
        %v1023 = vunpack.c.h.b16 %v667
        %v1024 = vunpack.c.l.b16 %v668
        %v1025 = vunpack.c.h.b16 %v668
        %v1026 = vunpack.c.l.b16 %v669
        %v1027 = vunpack.c.h.b16 %v669
        %v1028 = vunpack.c.l.b16 %v670
        %v1029 = vunpack.c.h.b16 %v670
        %v1030 = vunpack.c.l.b16 %v671
        %v1031 = vunpack.c.h.b16 %v671
        %v1032 = vunpack.c.l.b16 %v672
        %v1033 = vunpack.c.h.b16 %v672
        %v1034 = vunpack.c.l.b16 %v673
        %v1035 = vunpack.c.h.b16 %v673
        %v1036 = vunpack.c.l.b16 %v674
        %v1037 = vunpack.c.h.b16 %v674
        %v1038 = vunpack.c.l.b16 %v675
        %v1039 = vunpack.c.h.b16 %v675
        %v1040 = vunpack.c.l.b16 %v676
        %v1041 = vunpack.c.h.b16 %v676
        %v1042 = vunpack.c.l.b16 %v677
        %v1043 = vunpack.c.h.b16 %v677
        %v1044 = vunpack.c.l.b16 %v678
        %v1045 = vunpack.c.h.b16 %v678
        %v1046 = vunpack.c.l.b16 %v679
        %v1047 = vunpack.c.h.b16 %v679
        %v1048 = vunpack.c.l.b16 %v680
        %v1049 = vunpack.c.h.b16 %v680
        %v1050 = vunpack.c.l.b16 %v681
        %v1051 = vunpack.c.h.b16 %v681
        %v1052 = vunpack.c.l.b16 %v682
        %v1053 = vunpack.c.h.b16 %v682
        %v1054 = vunpack.c.l.b16 %v683
        %v1055 = vunpack.c.h.b16 %v683
        %v1056 = vunpack.c.l.b16 %v684
        %v1057 = vunpack.c.h.b16 %v684
        %v1058 = vunpack.c.l.b16 %v685
        %v1059 = vunpack.c.h.b16 %v685
        %v1060 = vunpack.c.l.b16 %v686
        %v1061 = vunpack.c.h.b16 %v686
        %v1062 = vunpack.c.l.b16 %v687
        %v1063 = vunpack.c.h.b16 %v687
        %v1064 = vunpack.c.l.b16 %v688
        %v1065 = vunpack.c.h.b16 %v688
        %v1066 = vunpack.c.l.b16 %v689
        %v1067 = vunpack.c.h.b16 %v689
        %v1068 = vunpack.c.l.b16 %v690
        %v1069 = vunpack.c.h.b16 %v690
        %v1070 = vunpack.c.l.b16 %v691
        %v1071 = vunpack.c.h.b16 %v691
        %v1072 = vunpack.c.l.b16 %v692
        %v1073 = vunpack.c.h.b16 %v692
        %v1074 = vunpack.c.l.b16 %v693
        %v1075 = vunpack.c.h.b16 %v693
        %v1076 = vunpack.c.l.b16 %v694
        %v1077 = vunpack.c.h.b16 %v694
        %v1078 = vunpack.c.l.b16 %v695
        %v1079 = vunpack.c.h.b16 %v695
        %v1080 = vunpack.c.l.b16 %v696
        %v1081 = vunpack.c.h.b16 %v696
        %v1082 = vunpack.c.l.b16 %v697
        %v1083 = vunpack.c.h.b16 %v697
        %v1084 = vunpack.c.l.b16 %v698
        %v1085 = vunpack.c.h.b16 %v698
        %v1086 = vunpack.c.l.b16 %v699
        %v1087 = vunpack.c.h.b16 %v699
        %v1088 = vunpack.c.l.b16 %v700
        %v1089 = vunpack.c.h.b16 %v700
        %v1090 = vunpack.c.l.b16 %v701
        %v1091 = vunpack.c.h.b16 %v701
        %v1092 = vunpack.c.l.b16 %v702
        %v1093 = vunpack.c.h.b16 %v702
        %v1094 = vunpack.c.l.b16 %v703
        %v1095 = vunpack.c.h.b16 %v703
        %v1096 = vunpack.c.l.b16 %v704
        %v1097 = vunpack.c.h.b16 %v704
        %v1098 = vunpack.c.l.b16 %v705
        %v1099 = vunpack.c.h.b16 %v705
        %v1100 = vunpack.c.l.b16 %v706
        %v1101 = vunpack.c.h.b16 %v706
        %v1102 = vunpack.c.l.b16 %v707
        %v1103 = vunpack.c.h.b16 %v707
        %v1104 = vunpack.c.l.b16 %v708
        %v1105 = vunpack.c.h.b16 %v708
        %v1106 = vunpack.c.l.b16 %v709
        %v1107 = vunpack.c.h.b16 %v709
        %v1108 = vunpack.c.l.b16 %v710
        %v1109 = vunpack.c.h.b16 %v710
        %v1110 = vunpack.c.l.b16 %v711
        %v1111 = vunpack.c.h.b16 %v711
        %v1112 = vunpack.c.l.b16 %v712
        %v1113 = vunpack.c.h.b16 %v712
        %v1114 = vunpack.c.l.b16 %v713
        %v1115 = vunpack.c.h.b16 %v713
        %v1116 = vunpack.c.l.b16 %v714
        %v1117 = vunpack.c.h.b16 %v714
        %v1118 = vunpack.c.l.b16 %v715
        %v1119 = vunpack.c.h.b16 %v715
        %v1120 = vunpack.c.l.b16 %v716
        %v1121 = vunpack.c.h.b16 %v716
        %v1122 = vunpack.c.l.b16 %v717
        %v1123 = vunpack.c.h.b16 %v717
        %v1124 = vunpack.c.l.b16 %v718
        %v1125 = vunpack.c.h.b16 %v718
        %v1126 = vunpack.c.l.b16 %v719
        %v1127 = vunpack.c.h.b16 %v719
        %v1128 = vunpack.c.l.b16 %v720
        %v1129 = vunpack.c.h.b16 %v720
        %v1130 = vunpack.c.l.b16 %v721
        %v1131 = vunpack.c.h.b16 %v721
        %v1132 = vunpack.c.l.b16 %v722
        %v1133 = vunpack.c.h.b16 %v722
        %v1134 = vunpack.c.l.b16 %v723
        %v1135 = vunpack.c.h.b16 %v723
        %v1136 = vunpack.c.l.b16 %v724
        %v1137 = vunpack.c.h.b16 %v724
        %v1138 = vunpack.c.l.b16 %v725
        %v1139 = vunpack.c.h.b16 %v725
        %v1140 = vunpack.c.l.b16 %v726
        %v1141 = vunpack.c.h.b16 %v726
        %v1142 = vunpack.c.l.b16 %v727
        %v1143 = vunpack.c.h.b16 %v727
        %v1144 = vunpack.c.l.b16 %v728
        %v1145 = vunpack.c.h.b16 %v728
        %v1146 = vunpack.c.l.b16 %v729
        %v1147 = vunpack.c.h.b16 %v729
        %v1148 = vunpack.c.l.b16 %v730
        %v1149 = vunpack.c.h.b16 %v730
        %v1150 = vunpack.c.l.b16 %v731
        %v1151 = vunpack.c.h.b16 %v731
        %v1152 = vunpack.c.l.b16 %v732
        %v1153 = vunpack.c.h.b16 %v732
        %v1154 = vunpack.c.l.b16 %v733
        %v1155 = vunpack.c.h.b16 %v733
        %v1156 = vunpack.c.l.b16 %v734
        %v1157 = vunpack.c.h.b16 %v734
        %v1158 = vunpack.c.l.b16 %v735
        %v1159 = vunpack.c.h.b16 %v735
        %v1160 = vunpack.c.l.b16 %v736
        %v1161 = vunpack.c.h.b16 %v736
        %v1162 = vunpack.c.l.b16 %v737
        %v1163 = vunpack.c.h.b16 %v737
        %v1164 = vpack.c.b16 %v916, %v908
        %v1165 = vpack.c.b16 %v917, %v909
        %v1166 = vpack.c.b16 %v918, %v910
        %v1167 = vpack.c.b16 %v919, %v911
        %v1168 = vpack.c.b16 %v920, %v912
        %v1169 = vpack.c.b16 %v921, %v913
        %v1170 = vpack.c.b16 %v922, %v914
        %v1171 = vpack.c.b16 %v923, %v915
        %v1172 = vpack.c.b16 %v932, %v924
        %v1173 = vpack.c.b16 %v933, %v925
        %v1174 = vpack.c.b16 %v934, %v926
        %v1175 = vpack.c.b16 %v935, %v927
        %v1176 = vpack.c.b16 %v936, %v928
        %v1177 = vpack.c.b16 %v937, %v929
        %v1178 = vpack.c.b16 %v938, %v930
        %v1179 = vpack.c.b16 %v939, %v931
        %v1180 = vpack.c.b16 %v948, %v940
        %v1181 = vpack.c.b16 %v949, %v941
        %v1182 = vpack.c.b16 %v950, %v942
        %v1183 = vpack.c.b16 %v951, %v943
        %v1184 = vpack.c.b16 %v952, %v944
        %v1185 = vpack.c.b16 %v953, %v945
        %v1186 = vpack.c.b16 %v954, %v946
        %v1187 = vpack.c.b16 %v955, %v947
        %v1188 = vpack.c.b16 %v964, %v956
        %v1189 = vpack.c.b16 %v965, %v957
        %v1190 = vpack.c.b16 %v966, %v958
        %v1191 = vpack.c.b16 %v967, %v959
        %v1192 = vpack.c.b16 %v968, %v960
        %v1193 = vpack.c.b16 %v969, %v961
        %v1194 = vpack.c.b16 %v970, %v962
        %v1195 = vpack.c.b16 %v971, %v963
        %v1196 = vpack.c.b16 %v980, %v972
        %v1197 = vpack.c.b16 %v981, %v973
        %v1198 = vpack.c.b16 %v982, %v974
        %v1199 = vpack.c.b16 %v983, %v975
        %v1200 = vpack.c.b16 %v984, %v976
        %v1201 = vpack.c.b16 %v985, %v977
        %v1202 = vpack.c.b16 %v986, %v978
        %v1203 = vpack.c.b16 %v987, %v979
        %v1204 = vpack.c.b16 %v996, %v988
        %v1205 = vpack.c.b16 %v997, %v989
        %v1206 = vpack.c.b16 %v998, %v990
        %v1207 = vpack.c.b16 %v999, %v991
        %v1208 = vpack.c.b16 %v1000, %v992
        %v1209 = vpack.c.b16 %v1001, %v993
        %v1210 = vpack.c.b16 %v1002, %v994
        %v1211 = vpack.c.b16 %v1003, %v995
        %v1212 = vpack.c.b16 %v1012, %v1004
        %v1213 = vpack.c.b16 %v1013, %v1005
        %v1214 = vpack.c.b16 %v1014, %v1006
        %v1215 = vpack.c.b16 %v1015, %v1007
        %v1216 = vpack.c.b16 %v1016, %v1008
        %v1217 = vpack.c.b16 %v1017, %v1009
        %v1218 = vpack.c.b16 %v1018, %v1010
        %v1219 = vpack.c.b16 %v1019, %v1011
        %v1220 = vpack.c.b16 %v1028, %v1020
        %v1221 = vpack.c.b16 %v1029, %v1021
        %v1222 = vpack.c.b16 %v1030, %v1022
        %v1223 = vpack.c.b16 %v1031, %v1023
        %v1224 = vpack.c.b16 %v1032, %v1024
        %v1225 = vpack.c.b16 %v1033, %v1025
        %v1226 = vpack.c.b16 %v1034, %v1026
        %v1227 = vpack.c.b16 %v1035, %v1027
        %v1228 = vpack.c.b16 %v1044, %v1036
        %v1229 = vpack.c.b16 %v1045, %v1037
        %v1230 = vpack.c.b16 %v1046, %v1038
        %v1231 = vpack.c.b16 %v1047, %v1039
        %v1232 = vpack.c.b16 %v1048, %v1040
        %v1233 = vpack.c.b16 %v1049, %v1041
        %v1234 = vpack.c.b16 %v1050, %v1042
        %v1235 = vpack.c.b16 %v1051, %v1043
        %v1236 = vpack.c.b16 %v1060, %v1052
        %v1237 = vpack.c.b16 %v1061, %v1053
        %v1238 = vpack.c.b16 %v1062, %v1054
        %v1239 = vpack.c.b16 %v1063, %v1055
        %v1240 = vpack.c.b16 %v1064, %v1056
        %v1241 = vpack.c.b16 %v1065, %v1057
        %v1242 = vpack.c.b16 %v1066, %v1058
        %v1243 = vpack.c.b16 %v1067, %v1059
        %v1244 = vpack.c.b16 %v1076, %v1068
        %v1245 = vpack.c.b16 %v1077, %v1069
        %v1246 = vpack.c.b16 %v1078, %v1070
        %v1247 = vpack.c.b16 %v1079, %v1071
        %v1248 = vpack.c.b16 %v1080, %v1072
        %v1249 = vpack.c.b16 %v1081, %v1073
        %v1250 = vpack.c.b16 %v1082, %v1074
        %v1251 = vpack.c.b16 %v1083, %v1075
        %v1252 = vpack.c.b16 %v1092, %v1084
        %v1253 = vpack.c.b16 %v1093, %v1085
        %v1254 = vpack.c.b16 %v1094, %v1086
        %v1255 = vpack.c.b16 %v1095, %v1087
        %v1256 = vpack.c.b16 %v1096, %v1088
        %v1257 = vpack.c.b16 %v1097, %v1089
        %v1258 = vpack.c.b16 %v1098, %v1090
        %v1259 = vpack.c.b16 %v1099, %v1091
        %v1260 = vpack.c.b16 %v1108, %v1100
        %v1261 = vpack.c.b16 %v1109, %v1101
        %v1262 = vpack.c.b16 %v1110, %v1102
        %v1263 = vpack.c.b16 %v1111, %v1103
        %v1264 = vpack.c.b16 %v1112, %v1104
        %v1265 = vpack.c.b16 %v1113, %v1105
        %v1266 = vpack.c.b16 %v1114, %v1106
        %v1267 = vpack.c.b16 %v1115, %v1107
        %v1268 = vpack.c.b16 %v1124, %v1116
        %v1269 = vpack.c.b16 %v1125, %v1117
        %v1270 = vpack.c.b16 %v1126, %v1118
        %v1271 = vpack.c.b16 %v1127, %v1119
        %v1272 = vpack.c.b16 %v1128, %v1120
        %v1273 = vpack.c.b16 %v1129, %v1121
        %v1274 = vpack.c.b16 %v1130, %v1122
        %v1275 = vpack.c.b16 %v1131, %v1123
        %v1276 = vpack.c.b16 %v1140, %v1132
        %v1277 = vpack.c.b16 %v1141, %v1133
        %v1278 = vpack.c.b16 %v1142, %v1134
        %v1279 = vpack.c.b16 %v1143, %v1135
        %v1280 = vpack.c.b16 %v1144, %v1136
        %v1281 = vpack.c.b16 %v1145, %v1137
        %v1282 = vpack.c.b16 %v1146, %v1138
        %v1283 = vpack.c.b16 %v1147, %v1139
        %v1284 = vpack.c.b16 %v1156, %v1148
        %v1285 = vpack.c.b16 %v1157, %v1149
        %v1286 = vpack.c.b16 %v1158, %v1150
        %v1287 = vpack.c.b16 %v1159, %v1151
        %v1288 = vpack.c.b16 %v1160, %v1152
        %v1289 = vpack.c.b16 %v1161, %v1153
        %v1290 = vpack.c.b16 %v1162, %v1154
        %v1291 = vpack.c.b16 %v1163, %v1155
        %1420 = vmatprep.subr.bf16.mxu0 %v1165
        %1421 = vmatpush1.bf16.msra.mxu0 %v1164
        %1422 = vmatprep.subr.bf16.mxu0 %v1173
        %1423 = vmatpush1.bf16.msra.mxu0 %v1172
        %1424 = vmatprep.subr.bf16.mxu0 %v1181
        %1425 = vmatpush1.bf16.msra.mxu0 %v1180
        %1426 = vmatprep.subr.bf16.mxu0 %v1189
        %1427 = vmatpush1.bf16.msra.mxu0 %v1188
        %1428 = vmatprep.subr.bf16.mxu0 %v1197
        %1429 = vmatpush1.bf16.msra.mxu0 %v1196
        %1430 = vmatprep.subr.bf16.mxu0 %v1205
        %1431 = vmatpush1.bf16.msra.mxu0 %v1204
        %1432 = vmatprep.subr.bf16.mxu0 %v1213
        %1433 = vmatpush1.bf16.msra.mxu0 %v1212
        %1434 = vmatprep.subr.bf16.mxu0 %v1221
        %1435 = vmatpush1.bf16.msra.mxu0 %v1220
        %1436 = vmatprep.subr.bf16.mxu0 %v1229
        %1437 = vmatpush1.bf16.msra.mxu0 %v1228
        %1438 = vmatprep.subr.bf16.mxu0 %v1237
        %1439 = vmatpush1.bf16.msra.mxu0 %v1236
        %1440 = vmatprep.subr.bf16.mxu0 %v1245
        %1441 = vmatpush1.bf16.msra.mxu0 %v1244
        %1442 = vmatprep.subr.bf16.mxu0 %v1253
        %1443 = vmatpush1.bf16.msra.mxu0 %v1252
        %1444 = vmatprep.subr.bf16.mxu0 %v1261
        %1445 = vmatpush1.bf16.msra.mxu0 %v1260
        %1446 = vmatprep.subr.bf16.mxu0 %v1269
        %1447 = vmatpush1.bf16.msra.mxu0 %v1268
        %1448 = vmatprep.subr.bf16.mxu0 %v1277
        %1449 = vmatpush1.bf16.msra.mxu0 %v1276
        %1450 = vmatprep.subr.bf16.mxu0 %v1285
        %1451 = vmatpush1.bf16.msra.mxu0 %v1284
        %1452 = vmatprep.mubr.bf16.mxu0 %v609
        %1453 = vmatmul.mubr.bf16.gmra.mrb[0].mxu0 %v608
        %v1454 = vpop.f32.mrb[0].mxu0
        %v1455 = vadd.f32 %v743, %v1454
        %v1456 = vpop.f32.mrb[0].mxu0
        %v1457 = vadd.f32 %v747, %v1456
        %v1458 = vpop.f32.mrb[0].mxu0
        %v1459 = vadd.f32 %v743, %v1458
        %v1460 = vpop.f32.mrb[0].mxu0
        %v1461 = vadd.f32 %v747, %v1460
        %1462 = vdwg.mxu0
        %1463 = vmatprep.subr.bf16.mxu0 %v1167
        %1464 = vmatpush1.bf16.msra.mxu0 %v1166
        %1465 = vmatprep.subr.bf16.mxu0 %v1175
        %1466 = vmatpush1.bf16.msra.mxu0 %v1174
        %1467 = vmatprep.subr.bf16.mxu0 %v1183
        %1468 = vmatpush1.bf16.msra.mxu0 %v1182
        %1469 = vmatprep.subr.bf16.mxu0 %v1191
        %1470 = vmatpush1.bf16.msra.mxu0 %v1190
        %1471 = vmatprep.subr.bf16.mxu0 %v1199
        %1472 = vmatpush1.bf16.msra.mxu0 %v1198
        %1473 = vmatprep.subr.bf16.mxu0 %v1207
        %1474 = vmatpush1.bf16.msra.mxu0 %v1206
        %1475 = vmatprep.subr.bf16.mxu0 %v1215
        %1476 = vmatpush1.bf16.msra.mxu0 %v1214
        %1477 = vmatprep.subr.bf16.mxu0 %v1223
        %1478 = vmatpush1.bf16.msra.mxu0 %v1222
        %1479 = vmatprep.subr.bf16.mxu0 %v1231
        %1480 = vmatpush1.bf16.msra.mxu0 %v1230
        %1481 = vmatprep.subr.bf16.mxu0 %v1239
        %1482 = vmatpush1.bf16.msra.mxu0 %v1238
        %1483 = vmatprep.subr.bf16.mxu0 %v1247
        %1484 = vmatpush1.bf16.msra.mxu0 %v1246
        %1485 = vmatprep.subr.bf16.mxu0 %v1255
        %1486 = vmatpush1.bf16.msra.mxu0 %v1254
        %1487 = vmatprep.subr.bf16.mxu0 %v1263
        %1488 = vmatpush1.bf16.msra.mxu0 %v1262
        %1489 = vmatprep.subr.bf16.mxu0 %v1271
        %1490 = vmatpush1.bf16.msra.mxu0 %v1270
        %1491 = vmatprep.subr.bf16.mxu0 %v1279
        %1492 = vmatpush1.bf16.msra.mxu0 %v1278
        %1493 = vmatprep.subr.bf16.mxu0 %v1287
        %1494 = vmatpush1.bf16.msra.mxu0 %v1286
        %1495 = vmatprep.mubr.bf16.mxu0 %v609
        %1496 = vmatmul.mubr.bf16.gmra.mrb[0].mxu0 %v608
        %v1497 = vpop.f32.mrb[0].mxu0
        %v1498 = vadd.f32 %v751, %v1497
        %v1499 = vpop.f32.mrb[0].mxu0
        %v1500 = vadd.f32 %v755, %v1499
        %v1501 = vpop.f32.mrb[0].mxu0
        %v1502 = vadd.f32 %v751, %v1501
        %v1503 = vpop.f32.mrb[0].mxu0
        %v1504 = vadd.f32 %v755, %v1503
        %1505 = vdwg.mxu0
        %1506 = vmatprep.subr.bf16.mxu0 %v1169
        %1507 = vmatpush1.bf16.msra.mxu0 %v1168
        %1508 = vmatprep.subr.bf16.mxu0 %v1177
        %1509 = vmatpush1.bf16.msra.mxu0 %v1176
        %1510 = vmatprep.subr.bf16.mxu0 %v1185
        %1511 = vmatpush1.bf16.msra.mxu0 %v1184
        %1512 = vmatprep.subr.bf16.mxu0 %v1193
        %1513 = vmatpush1.bf16.msra.mxu0 %v1192
        %1514 = vmatprep.subr.bf16.mxu0 %v1201
        %1515 = vmatpush1.bf16.msra.mxu0 %v1200
        %1516 = vmatprep.subr.bf16.mxu0 %v1209
        %1517 = vmatpush1.bf16.msra.mxu0 %v1208
        %1518 = vmatprep.subr.bf16.mxu0 %v1217
        %1519 = vmatpush1.bf16.msra.mxu0 %v1216
        %1520 = vmatprep.subr.bf16.mxu0 %v1225
        %1521 = vmatpush1.bf16.msra.mxu0 %v1224
        %1522 = vmatprep.subr.bf16.mxu0 %v1233
        %1523 = vmatpush1.bf16.msra.mxu0 %v1232
        %1524 = vmatprep.subr.bf16.mxu0 %v1241
        %1525 = vmatpush1.bf16.msra.mxu0 %v1240
        %1526 = vmatprep.subr.bf16.mxu0 %v1249
        %1527 = vmatpush1.bf16.msra.mxu0 %v1248
        %1528 = vmatprep.subr.bf16.mxu0 %v1257
        %1529 = vmatpush1.bf16.msra.mxu0 %v1256
        %1530 = vmatprep.subr.bf16.mxu0 %v1265
        %1531 = vmatpush1.bf16.msra.mxu0 %v1264
        %1532 = vmatprep.subr.bf16.mxu0 %v1273
        %1533 = vmatpush1.bf16.msra.mxu0 %v1272
        %1534 = vmatprep.subr.bf16.mxu0 %v1281
        %1535 = vmatpush1.bf16.msra.mxu0 %v1280
        %1536 = vmatprep.subr.bf16.mxu0 %v1289
        %1537 = vmatpush1.bf16.msra.mxu0 %v1288
        %1538 = vmatprep.mubr.bf16.mxu0 %v609
        %1539 = vmatmul.mubr.bf16.gmra.mrb[0].mxu0 %v608
        %v1540 = vpop.f32.mrb[0].mxu0
        %v1541 = vadd.f32 %v759, %v1540
        %v1542 = vpop.f32.mrb[0].mxu0
        %v1543 = vadd.f32 %v763, %v1542
        %v1544 = vpop.f32.mrb[0].mxu0
        %v1545 = vadd.f32 %v759, %v1544
        %v1546 = vpop.f32.mrb[0].mxu0
        %v1547 = vadd.f32 %v763, %v1546
        %1548 = vdwg.mxu0
        %1549 = vmatprep.subr.bf16.mxu0 %v1171
        %1550 = vmatpush1.bf16.msra.mxu0 %v1170
        %1551 = vmatprep.subr.bf16.mxu0 %v1179
        %1552 = vmatpush1.bf16.msra.mxu0 %v1178
        %1553 = vmatprep.subr.bf16.mxu0 %v1187
        %1554 = vmatpush1.bf16.msra.mxu0 %v1186
        %1555 = vmatprep.subr.bf16.mxu0 %v1195
        %1556 = vmatpush1.bf16.msra.mxu0 %v1194
        %1557 = vmatprep.subr.bf16.mxu0 %v1203
        %1558 = vmatpush1.bf16.msra.mxu0 %v1202
        %1559 = vmatprep.subr.bf16.mxu0 %v1211
        %1560 = vmatpush1.bf16.msra.mxu0 %v1210
        %1561 = vmatprep.subr.bf16.mxu0 %v1219
        %1562 = vmatpush1.bf16.msra.mxu0 %v1218
        %1563 = vmatprep.subr.bf16.mxu0 %v1227
        %1564 = vmatpush1.bf16.msra.mxu0 %v1226
        %1565 = vmatprep.subr.bf16.mxu0 %v1235
        %1566 = vmatpush1.bf16.msra.mxu0 %v1234
        %1567 = vmatprep.subr.bf16.mxu0 %v1243
        %1568 = vmatpush1.bf16.msra.mxu0 %v1242
        %1569 = vmatprep.subr.bf16.mxu0 %v1251
        %1570 = vmatpush1.bf16.msra.mxu0 %v1250
        %1571 = vmatprep.subr.bf16.mxu0 %v1259
        %1572 = vmatpush1.bf16.msra.mxu0 %v1258
        %1573 = vmatprep.subr.bf16.mxu0 %v1267
        %1574 = vmatpush1.bf16.msra.mxu0 %v1266
        %1575 = vmatprep.subr.bf16.mxu0 %v1275
        %1576 = vmatpush1.bf16.msra.mxu0 %v1274
        %1577 = vmatprep.subr.bf16.mxu0 %v1283
        %1578 = vmatpush1.bf16.msra.mxu0 %v1282
        %1579 = vmatprep.subr.bf16.mxu0 %v1291
        %1580 = vmatpush1.bf16.msra.mxu0 %v1290
        %1581 = vmatprep.mubr.bf16.mxu0 %v609
        %1582 = vmatmul.mubr.bf16.gmra.mrb[0].mxu0 %v608
        %v1583 = vpop.f32.mrb[0].mxu0
        %v1584 = vadd.f32 %v767, %v1583
        %v1585 = vpop.f32.mrb[0].mxu0
        %v1586 = vadd.f32 %v771, %v1585
        %v1587 = vpop.f32.mrb[0].mxu0
        %v1588 = vadd.f32 %v767, %v1587
        %v1589 = vpop.f32.mrb[0].mxu0
        %v1590 = vadd.f32 %v771, %v1589
        %1591 = vdwg.mxu0
        %v1592 = vmax.f32 %v1455, 0.0
        %v1593 = vmax.f32 %v1457, 0.0
        %v1594 = vmax.f32 %v1498, 0.0
        %v1595 = vmax.f32 %v1500, 0.0
        %v1596 = vmax.f32 %v1541, 0.0
        %v1597 = vmax.f32 %v1543, 0.0
        %v1598 = vmax.f32 %v1584, 0.0
        %v1599 = vmax.f32 %v1586, 0.0
        %v1600 = vmax.f32 %v1459, 0.0
        %v1601 = vmax.f32 %v1461, 0.0
        %v1602 = vmax.f32 %v1502, 0.0
        %v1603 = vmax.f32 %v1504, 0.0
        %v1604 = vmax.f32 %v1545, 0.0
        %v1605 = vmax.f32 %v1547, 0.0
        %v1606 = vmax.f32 %v1588, 0.0
        %v1607 = vmax.f32 %v1590, 0.0
        %v1608 = vpack.c.bf16 %v1600, %v1592
        %v1609 = vpack.c.bf16 %v1601, %v1593
        %v1610 = vpack.c.bf16 %v1602, %v1594
        %v1611 = vpack.c.bf16 %v1603, %v1595
        %v1612 = vpack.c.bf16 %v1604, %v1596
        %v1613 = vpack.c.bf16 %v1605, %v1597
        %v1614 = vpack.c.bf16 %v1606, %v1598
        %v1615 = vpack.c.bf16 %v1607, %v1599
        %v1616 = vld [vmem:[%s423] sm:$0xff]
        %v1617 = vld [vmem:[%s423 + $0x8] sm:$0xff]
        %v1618 = vld [vmem:[%s423 + $0x10] sm:$0xff]
        %v1619 = vld [vmem:[%s423 + $0x18] sm:$0xff]
        %v1620 = vld [vmem:[%s423 + $0x20] sm:$0xff]
        %v1621 = vld [vmem:[%s423 + $0x28] sm:$0xff]
        %v1622 = vld [vmem:[%s423 + $0x30] sm:$0xff]
        %v1623 = vld [vmem:[%s423 + $0x38] sm:$0xff]
        %v1624 = vld [vmem:[%s423 + $0x40] sm:$0xff]
        %v1625 = vld [vmem:[%s423 + $0x48] sm:$0xff]
        %v1626 = vld [vmem:[%s423 + $0x50] sm:$0xff]
        %v1627 = vld [vmem:[%s423 + $0x58] sm:$0xff]
        %v1628 = vld [vmem:[%s423 + $0x60] sm:$0xff]
        %v1629 = vld [vmem:[%s423 + $0x68] sm:$0xff]
        %v1630 = vld [vmem:[%s423 + $0x70] sm:$0xff]
        %v1631 = vld [vmem:[%s423 + $0x78] sm:$0xff]
        %v1632 = vld [vmem:[%s423 + $0x80] sm:$0xff]
        %v1633 = vld [vmem:[%s423 + $0x88] sm:$0xff]
        %v1634 = vld [vmem:[%s423 + $0x90] sm:$0xff]
        %v1635 = vld [vmem:[%s423 + $0x98] sm:$0xff]
        %v1636 = vld [vmem:[%s423 + $0xa0] sm:$0xff]
        %v1637 = vld [vmem:[%s423 + $0xa8] sm:$0xff]
        %v1638 = vld [vmem:[%s423 + $0xb0] sm:$0xff]
        %v1639 = vld [vmem:[%s423 + $0xb8] sm:$0xff]
        %v1640 = vld [vmem:[%s423 + $0xc0] sm:$0xff]
        %v1641 = vld [vmem:[%s423 + $0xc8] sm:$0xff]
        %v1642 = vld [vmem:[%s423 + $0xd0] sm:$0xff]
        %v1643 = vld [vmem:[%s423 + $0xd8] sm:$0xff]
        %v1644 = vld [vmem:[%s423 + $0xe0] sm:$0xff]
        %v1645 = vld [vmem:[%s423 + $0xe8] sm:$0xff]
        %v1646 = vld [vmem:[%s423 + $0xf0] sm:$0xff]
        %v1647 = vld [vmem:[%s423 + $0xf8] sm:$0xff]
        %v1648 = vld [vmem:[%s423 + $0x100] sm:$0xff]
        %v1649 = vld [vmem:[%s423 + $0x108] sm:$0xff]
        %v1650 = vld [vmem:[%s423 + $0x110] sm:$0xff]
        %v1651 = vld [vmem:[%s423 + $0x118] sm:$0xff]
        %v1652 = vld [vmem:[%s423 + $0x120] sm:$0xff]
        %v1653 = vld [vmem:[%s423 + $0x128] sm:$0xff]
        %v1654 = vld [vmem:[%s423 + $0x130] sm:$0xff]
        %v1655 = vld [vmem:[%s423 + $0x138] sm:$0xff]
        %v1656 = vld [vmem:[%s423 + $0x140] sm:$0xff]
        %v1657 = vld [vmem:[%s423 + $0x148] sm:$0xff]
        %v1658 = vld [vmem:[%s423 + $0x150] sm:$0xff]
        %v1659 = vld [vmem:[%s423 + $0x158] sm:$0xff]
        %v1660 = vld [vmem:[%s423 + $0x160] sm:$0xff]
        %v1661 = vld [vmem:[%s423 + $0x168] sm:$0xff]
        %v1662 = vld [vmem:[%s423 + $0x170] sm:$0xff]
        %v1663 = vld [vmem:[%s423 + $0x178] sm:$0xff]
        %v1664 = vld [vmem:[%s423 + $0x180] sm:$0xff]
        %v1665 = vld [vmem:[%s423 + $0x188] sm:$0xff]
        %v1666 = vld [vmem:[%s423 + $0x190] sm:$0xff]
        %v1667 = vld [vmem:[%s423 + $0x198] sm:$0xff]
        %v1668 = vld [vmem:[%s423 + $0x1a0] sm:$0xff]
        %v1669 = vld [vmem:[%s423 + $0x1a8] sm:$0xff]
        %v1670 = vld [vmem:[%s423 + $0x1b0] sm:$0xff]
        %v1671 = vld [vmem:[%s423 + $0x1b8] sm:$0xff]
        %v1672 = vld [vmem:[%s423 + $0x1c0] sm:$0xff]
        %v1673 = vld [vmem:[%s423 + $0x1c8] sm:$0xff]
        %v1674 = vld [vmem:[%s423 + $0x1d0] sm:$0xff]
        %v1675 = vld [vmem:[%s423 + $0x1d8] sm:$0xff]
        %v1676 = vld [vmem:[%s423 + $0x1e0] sm:$0xff]
        %v1677 = vld [vmem:[%s423 + $0x1e8] sm:$0xff]
        %v1678 = vld [vmem:[%s423 + $0x1f0] sm:$0xff]
        %v1679 = vld [vmem:[%s423 + $0x1f8] sm:$0xff]
        %v1680 = vld [vmem:[%s423 + $0x200] sm:$0xff]
        %v1681 = vld [vmem:[%s423 + $0x208] sm:$0xff]
        %v1682 = vld [vmem:[%s423 + $0x210] sm:$0xff]
        %v1683 = vld [vmem:[%s423 + $0x218] sm:$0xff]
        %v1684 = vld [vmem:[%s423 + $0x220] sm:$0xff]
        %v1685 = vld [vmem:[%s423 + $0x228] sm:$0xff]
        %v1686 = vld [vmem:[%s423 + $0x230] sm:$0xff]
        %v1687 = vld [vmem:[%s423 + $0x238] sm:$0xff]
        %v1688 = vld [vmem:[%s423 + $0x240] sm:$0xff]
        %v1689 = vld [vmem:[%s423 + $0x248] sm:$0xff]
        %v1690 = vld [vmem:[%s423 + $0x250] sm:$0xff]
        %v1691 = vld [vmem:[%s423 + $0x258] sm:$0xff]
        %v1692 = vld [vmem:[%s423 + $0x260] sm:$0xff]
        %v1693 = vld [vmem:[%s423 + $0x268] sm:$0xff]
        %v1694 = vld [vmem:[%s423 + $0x270] sm:$0xff]
        %v1695 = vld [vmem:[%s423 + $0x278] sm:$0xff]
        %v1696 = vld [vmem:[%s423 + $0x280] sm:$0xff]
        %v1697 = vld [vmem:[%s423 + $0x288] sm:$0xff]
        %v1698 = vld [vmem:[%s423 + $0x290] sm:$0xff]
        %v1699 = vld [vmem:[%s423 + $0x298] sm:$0xff]
        %v1700 = vld [vmem:[%s423 + $0x2a0] sm:$0xff]
        %v1701 = vld [vmem:[%s423 + $0x2a8] sm:$0xff]
        %v1702 = vld [vmem:[%s423 + $0x2b0] sm:$0xff]
        %v1703 = vld [vmem:[%s423 + $0x2b8] sm:$0xff]
        %v1704 = vld [vmem:[%s423 + $0x2c0] sm:$0xff]
        %v1705 = vld [vmem:[%s423 + $0x2c8] sm:$0xff]
        %v1706 = vld [vmem:[%s423 + $0x2d0] sm:$0xff]
        %v1707 = vld [vmem:[%s423 + $0x2d8] sm:$0xff]
        %v1708 = vld [vmem:[%s423 + $0x2e0] sm:$0xff]
        %v1709 = vld [vmem:[%s423 + $0x2e8] sm:$0xff]
        %v1710 = vld [vmem:[%s423 + $0x2f0] sm:$0xff]
        %v1711 = vld [vmem:[%s423 + $0x2f8] sm:$0xff]
        %v1712 = vld [vmem:[%s423 + $0x300] sm:$0xff]
        %v1713 = vld [vmem:[%s423 + $0x308] sm:$0xff]
        %v1714 = vld [vmem:[%s423 + $0x310] sm:$0xff]
        %v1715 = vld [vmem:[%s423 + $0x318] sm:$0xff]
        %v1716 = vld [vmem:[%s423 + $0x320] sm:$0xff]
        %v1717 = vld [vmem:[%s423 + $0x328] sm:$0xff]
        %v1718 = vld [vmem:[%s423 + $0x330] sm:$0xff]
        %v1719 = vld [vmem:[%s423 + $0x338] sm:$0xff]
        %v1720 = vld [vmem:[%s423 + $0x340] sm:$0xff]
        %v1721 = vld [vmem:[%s423 + $0x348] sm:$0xff]
        %v1722 = vld [vmem:[%s423 + $0x350] sm:$0xff]
        %v1723 = vld [vmem:[%s423 + $0x358] sm:$0xff]
        %v1724 = vld [vmem:[%s423 + $0x360] sm:$0xff]
        %v1725 = vld [vmem:[%s423 + $0x368] sm:$0xff]
        %v1726 = vld [vmem:[%s423 + $0x370] sm:$0xff]
        %v1727 = vld [vmem:[%s423 + $0x378] sm:$0xff]
        %v1728 = vld [vmem:[%s423 + $0x380] sm:$0xff]
        %v1729 = vld [vmem:[%s423 + $0x388] sm:$0xff]
        %v1730 = vld [vmem:[%s423 + $0x390] sm:$0xff]
        %v1731 = vld [vmem:[%s423 + $0x398] sm:$0xff]
        %v1732 = vld [vmem:[%s423 + $0x3a0] sm:$0xff]
        %v1733 = vld [vmem:[%s423 + $0x3a8] sm:$0xff]
        %v1734 = vld [vmem:[%s423 + $0x3b0] sm:$0xff]
        %v1735 = vld [vmem:[%s423 + $0x3b8] sm:$0xff]
        %v1736 = vld [vmem:[%s423 + $0x3c0] sm:$0xff]
        %v1737 = vld [vmem:[%s423 + $0x3c8] sm:$0xff]
        %v1738 = vld [vmem:[%s423 + $0x3d0] sm:$0xff]
        %v1739 = vld [vmem:[%s423 + $0x3d8] sm:$0xff]
        %v1740 = vld [vmem:[%s423 + $0x3e0] sm:$0xff]
        %v1741 = vld [vmem:[%s423 + $0x3e8] sm:$0xff]
        %v1742 = vld [vmem:[%s423 + $0x3f0] sm:$0xff]
        %v1743 = vld [vmem:[%s423 + $0x3f8] sm:$0xff]
        %v1744 = vld [vmem:[%s432] sm:$0x3]
        %v1746 = vlaneseq
        %v1747 = vshrl.u32 %v1746, 7
        %v1748 = vsub.s32 0, %v1747
        %v1749 = vrot.slane %v1744, %v1748
        %v1750 = vlaneseq
        %v1751 = vshrl.u32 %v1750, 7
        %v1752 = vsub.s32 1, %v1751
        %v1753 = vrot.slane %v1744, %v1752
        %v1884 = vunpack.c.l.b16 %v1616
        %v1885 = vunpack.c.h.b16 %v1616
        %v1886 = vunpack.c.l.b16 %v1617
        %v1887 = vunpack.c.h.b16 %v1617
        %v1888 = vunpack.c.l.b16 %v1618
        %v1889 = vunpack.c.h.b16 %v1618
        %v1890 = vunpack.c.l.b16 %v1619
        %v1891 = vunpack.c.h.b16 %v1619
        %v1892 = vunpack.c.l.b16 %v1620
        %v1893 = vunpack.c.h.b16 %v1620
        %v1894 = vunpack.c.l.b16 %v1621
        %v1895 = vunpack.c.h.b16 %v1621
        %v1896 = vunpack.c.l.b16 %v1622
        %v1897 = vunpack.c.h.b16 %v1622
        %v1898 = vunpack.c.l.b16 %v1623
        %v1899 = vunpack.c.h.b16 %v1623
        %v1900 = vunpack.c.l.b16 %v1624
        %v1901 = vunpack.c.h.b16 %v1624
        %v1902 = vunpack.c.l.b16 %v1625
        %v1903 = vunpack.c.h.b16 %v1625
        %v1904 = vunpack.c.l.b16 %v1626
        %v1905 = vunpack.c.h.b16 %v1626
        %v1906 = vunpack.c.l.b16 %v1627
        %v1907 = vunpack.c.h.b16 %v1627
        %v1908 = vunpack.c.l.b16 %v1628
        %v1909 = vunpack.c.h.b16 %v1628
        %v1910 = vunpack.c.l.b16 %v1629
        %v1911 = vunpack.c.h.b16 %v1629
        %v1912 = vunpack.c.l.b16 %v1630
        %v1913 = vunpack.c.h.b16 %v1630
        %v1914 = vunpack.c.l.b16 %v1631
        %v1915 = vunpack.c.h.b16 %v1631
        %v1916 = vunpack.c.l.b16 %v1632
        %v1917 = vunpack.c.h.b16 %v1632
        %v1918 = vunpack.c.l.b16 %v1633
        %v1919 = vunpack.c.h.b16 %v1633
        %v1920 = vunpack.c.l.b16 %v1634
        %v1921 = vunpack.c.h.b16 %v1634
        %v1922 = vunpack.c.l.b16 %v1635
        %v1923 = vunpack.c.h.b16 %v1635
        %v1924 = vunpack.c.l.b16 %v1636
        %v1925 = vunpack.c.h.b16 %v1636
        %v1926 = vunpack.c.l.b16 %v1637
        %v1927 = vunpack.c.h.b16 %v1637
        %v1928 = vunpack.c.l.b16 %v1638
        %v1929 = vunpack.c.h.b16 %v1638
        %v1930 = vunpack.c.l.b16 %v1639
        %v1931 = vunpack.c.h.b16 %v1639
        %v1932 = vunpack.c.l.b16 %v1640
        %v1933 = vunpack.c.h.b16 %v1640
        %v1934 = vunpack.c.l.b16 %v1641
        %v1935 = vunpack.c.h.b16 %v1641
        %v1936 = vunpack.c.l.b16 %v1642
        %v1937 = vunpack.c.h.b16 %v1642
        %v1938 = vunpack.c.l.b16 %v1643
        %v1939 = vunpack.c.h.b16 %v1643
        %v1940 = vunpack.c.l.b16 %v1644
        %v1941 = vunpack.c.h.b16 %v1644
        %v1942 = vunpack.c.l.b16 %v1645
        %v1943 = vunpack.c.h.b16 %v1645
        %v1944 = vunpack.c.l.b16 %v1646
        %v1945 = vunpack.c.h.b16 %v1646
        %v1946 = vunpack.c.l.b16 %v1647
        %v1947 = vunpack.c.h.b16 %v1647
        %v1948 = vunpack.c.l.b16 %v1648
        %v1949 = vunpack.c.h.b16 %v1648
        %v1950 = vunpack.c.l.b16 %v1649
        %v1951 = vunpack.c.h.b16 %v1649
        %v1952 = vunpack.c.l.b16 %v1650
        %v1953 = vunpack.c.h.b16 %v1650
        %v1954 = vunpack.c.l.b16 %v1651
        %v1955 = vunpack.c.h.b16 %v1651
        %v1956 = vunpack.c.l.b16 %v1652
        %v1957 = vunpack.c.h.b16 %v1652
        %v1958 = vunpack.c.l.b16 %v1653
        %v1959 = vunpack.c.h.b16 %v1653
        %v1960 = vunpack.c.l.b16 %v1654
        %v1961 = vunpack.c.h.b16 %v1654
        %v1962 = vunpack.c.l.b16 %v1655
        %v1963 = vunpack.c.h.b16 %v1655
        %v1964 = vunpack.c.l.b16 %v1656
        %v1965 = vunpack.c.h.b16 %v1656
        %v1966 = vunpack.c.l.b16 %v1657
        %v1967 = vunpack.c.h.b16 %v1657
        %v1968 = vunpack.c.l.b16 %v1658
        %v1969 = vunpack.c.h.b16 %v1658
        %v1970 = vunpack.c.l.b16 %v1659
        %v1971 = vunpack.c.h.b16 %v1659
        %v1972 = vunpack.c.l.b16 %v1660
        %v1973 = vunpack.c.h.b16 %v1660
        %v1974 = vunpack.c.l.b16 %v1661
        %v1975 = vunpack.c.h.b16 %v1661
        %v1976 = vunpack.c.l.b16 %v1662
        %v1977 = vunpack.c.h.b16 %v1662
        %v1978 = vunpack.c.l.b16 %v1663
        %v1979 = vunpack.c.h.b16 %v1663
        %v1980 = vunpack.c.l.b16 %v1664
        %v1981 = vunpack.c.h.b16 %v1664
        %v1982 = vunpack.c.l.b16 %v1665
        %v1983 = vunpack.c.h.b16 %v1665
        %v1984 = vunpack.c.l.b16 %v1666
        %v1985 = vunpack.c.h.b16 %v1666
        %v1986 = vunpack.c.l.b16 %v1667
        %v1987 = vunpack.c.h.b16 %v1667
        %v1988 = vunpack.c.l.b16 %v1668
        %v1989 = vunpack.c.h.b16 %v1668
        %v1990 = vunpack.c.l.b16 %v1669
        %v1991 = vunpack.c.h.b16 %v1669
        %v1992 = vunpack.c.l.b16 %v1670
        %v1993 = vunpack.c.h.b16 %v1670
        %v1994 = vunpack.c.l.b16 %v1671
        %v1995 = vunpack.c.h.b16 %v1671
        %v1996 = vunpack.c.l.b16 %v1672
        %v1997 = vunpack.c.h.b16 %v1672
        %v1998 = vunpack.c.l.b16 %v1673
        %v1999 = vunpack.c.h.b16 %v1673
        %v2000 = vunpack.c.l.b16 %v1674
        %v2001 = vunpack.c.h.b16 %v1674
        %v2002 = vunpack.c.l.b16 %v1675
        %v2003 = vunpack.c.h.b16 %v1675
        %v2004 = vunpack.c.l.b16 %v1676
        %v2005 = vunpack.c.h.b16 %v1676
        %v2006 = vunpack.c.l.b16 %v1677
        %v2007 = vunpack.c.h.b16 %v1677
        %v2008 = vunpack.c.l.b16 %v1678
        %v2009 = vunpack.c.h.b16 %v1678
        %v2010 = vunpack.c.l.b16 %v1679
        %v2011 = vunpack.c.h.b16 %v1679
        %v2012 = vunpack.c.l.b16 %v1680
        %v2013 = vunpack.c.h.b16 %v1680
        %v2014 = vunpack.c.l.b16 %v1681
        %v2015 = vunpack.c.h.b16 %v1681
        %v2016 = vunpack.c.l.b16 %v1682
        %v2017 = vunpack.c.h.b16 %v1682
        %v2018 = vunpack.c.l.b16 %v1683
        %v2019 = vunpack.c.h.b16 %v1683
        %v2020 = vunpack.c.l.b16 %v1684
        %v2021 = vunpack.c.h.b16 %v1684
        %v2022 = vunpack.c.l.b16 %v1685
        %v2023 = vunpack.c.h.b16 %v1685
        %v2024 = vunpack.c.l.b16 %v1686
        %v2025 = vunpack.c.h.b16 %v1686
        %v2026 = vunpack.c.l.b16 %v1687
        %v2027 = vunpack.c.h.b16 %v1687
        %v2028 = vunpack.c.l.b16 %v1688
        %v2029 = vunpack.c.h.b16 %v1688
        %v2030 = vunpack.c.l.b16 %v1689
        %v2031 = vunpack.c.h.b16 %v1689
        %v2032 = vunpack.c.l.b16 %v1690
        %v2033 = vunpack.c.h.b16 %v1690
        %v2034 = vunpack.c.l.b16 %v1691
        %v2035 = vunpack.c.h.b16 %v1691
        %v2036 = vunpack.c.l.b16 %v1692
        %v2037 = vunpack.c.h.b16 %v1692
        %v2038 = vunpack.c.l.b16 %v1693
        %v2039 = vunpack.c.h.b16 %v1693
        %v2040 = vunpack.c.l.b16 %v1694
        %v2041 = vunpack.c.h.b16 %v1694
        %v2042 = vunpack.c.l.b16 %v1695
        %v2043 = vunpack.c.h.b16 %v1695
        %v2044 = vunpack.c.l.b16 %v1696
        %v2045 = vunpack.c.h.b16 %v1696
        %v2046 = vunpack.c.l.b16 %v1697
        %v2047 = vunpack.c.h.b16 %v1697
        %v2048 = vunpack.c.l.b16 %v1698
        %v2049 = vunpack.c.h.b16 %v1698
        %v2050 = vunpack.c.l.b16 %v1699
        %v2051 = vunpack.c.h.b16 %v1699
        %v2052 = vunpack.c.l.b16 %v1700
        %v2053 = vunpack.c.h.b16 %v1700
        %v2054 = vunpack.c.l.b16 %v1701
        %v2055 = vunpack.c.h.b16 %v1701
        %v2056 = vunpack.c.l.b16 %v1702
        %v2057 = vunpack.c.h.b16 %v1702
        %v2058 = vunpack.c.l.b16 %v1703
        %v2059 = vunpack.c.h.b16 %v1703
        %v2060 = vunpack.c.l.b16 %v1704
        %v2061 = vunpack.c.h.b16 %v1704
        %v2062 = vunpack.c.l.b16 %v1705
        %v2063 = vunpack.c.h.b16 %v1705
        %v2064 = vunpack.c.l.b16 %v1706
        %v2065 = vunpack.c.h.b16 %v1706
        %v2066 = vunpack.c.l.b16 %v1707
        %v2067 = vunpack.c.h.b16 %v1707
        %v2068 = vunpack.c.l.b16 %v1708
        %v2069 = vunpack.c.h.b16 %v1708
        %v2070 = vunpack.c.l.b16 %v1709
        %v2071 = vunpack.c.h.b16 %v1709
        %v2072 = vunpack.c.l.b16 %v1710
        %v2073 = vunpack.c.h.b16 %v1710
        %v2074 = vunpack.c.l.b16 %v1711
        %v2075 = vunpack.c.h.b16 %v1711
        %v2076 = vunpack.c.l.b16 %v1712
        %v2077 = vunpack.c.h.b16 %v1712
        %v2078 = vunpack.c.l.b16 %v1713
        %v2079 = vunpack.c.h.b16 %v1713
        %v2080 = vunpack.c.l.b16 %v1714
        %v2081 = vunpack.c.h.b16 %v1714
        %v2082 = vunpack.c.l.b16 %v1715
        %v2083 = vunpack.c.h.b16 %v1715
        %v2084 = vunpack.c.l.b16 %v1716
        %v2085 = vunpack.c.h.b16 %v1716
        %v2086 = vunpack.c.l.b16 %v1717
        %v2087 = vunpack.c.h.b16 %v1717
        %v2088 = vunpack.c.l.b16 %v1718
        %v2089 = vunpack.c.h.b16 %v1718
        %v2090 = vunpack.c.l.b16 %v1719
        %v2091 = vunpack.c.h.b16 %v1719
        %v2092 = vunpack.c.l.b16 %v1720
        %v2093 = vunpack.c.h.b16 %v1720
        %v2094 = vunpack.c.l.b16 %v1721
        %v2095 = vunpack.c.h.b16 %v1721
        %v2096 = vunpack.c.l.b16 %v1722
        %v2097 = vunpack.c.h.b16 %v1722
        %v2098 = vunpack.c.l.b16 %v1723
        %v2099 = vunpack.c.h.b16 %v1723
        %v2100 = vunpack.c.l.b16 %v1724
        %v2101 = vunpack.c.h.b16 %v1724
        %v2102 = vunpack.c.l.b16 %v1725
        %v2103 = vunpack.c.h.b16 %v1725
        %v2104 = vunpack.c.l.b16 %v1726
        %v2105 = vunpack.c.h.b16 %v1726
        %v2106 = vunpack.c.l.b16 %v1727
        %v2107 = vunpack.c.h.b16 %v1727
        %v2108 = vunpack.c.l.b16 %v1728
        %v2109 = vunpack.c.h.b16 %v1728
        %v2110 = vunpack.c.l.b16 %v1729
        %v2111 = vunpack.c.h.b16 %v1729
        %v2112 = vunpack.c.l.b16 %v1730
        %v2113 = vunpack.c.h.b16 %v1730
        %v2114 = vunpack.c.l.b16 %v1731
        %v2115 = vunpack.c.h.b16 %v1731
        %v2116 = vunpack.c.l.b16 %v1732
        %v2117 = vunpack.c.h.b16 %v1732
        %v2118 = vunpack.c.l.b16 %v1733
        %v2119 = vunpack.c.h.b16 %v1733
        %v2120 = vunpack.c.l.b16 %v1734
        %v2121 = vunpack.c.h.b16 %v1734
        %v2122 = vunpack.c.l.b16 %v1735
        %v2123 = vunpack.c.h.b16 %v1735
        %v2124 = vunpack.c.l.b16 %v1736
        %v2125 = vunpack.c.h.b16 %v1736
        %v2126 = vunpack.c.l.b16 %v1737
        %v2127 = vunpack.c.h.b16 %v1737
        %v2128 = vunpack.c.l.b16 %v1738
        %v2129 = vunpack.c.h.b16 %v1738
        %v2130 = vunpack.c.l.b16 %v1739
        %v2131 = vunpack.c.h.b16 %v1739
        %v2132 = vunpack.c.l.b16 %v1740
        %v2133 = vunpack.c.h.b16 %v1740
        %v2134 = vunpack.c.l.b16 %v1741
        %v2135 = vunpack.c.h.b16 %v1741
        %v2136 = vunpack.c.l.b16 %v1742
        %v2137 = vunpack.c.h.b16 %v1742
        %v2138 = vunpack.c.l.b16 %v1743
        %v2139 = vunpack.c.h.b16 %v1743
        %v2140 = vpack.c.b16 %v1886, %v1884
        %v2141 = vpack.c.b16 %v1887, %v1885
        %v2142 = vpack.c.b16 %v1890, %v1888
        %v2143 = vpack.c.b16 %v1891, %v1889
        %v2144 = vpack.c.b16 %v1894, %v1892
        %v2145 = vpack.c.b16 %v1895, %v1893
        %v2146 = vpack.c.b16 %v1898, %v1896
        %v2147 = vpack.c.b16 %v1899, %v1897
        %v2148 = vpack.c.b16 %v1902, %v1900
        %v2149 = vpack.c.b16 %v1903, %v1901
        %v2150 = vpack.c.b16 %v1906, %v1904
        %v2151 = vpack.c.b16 %v1907, %v1905
        %v2152 = vpack.c.b16 %v1910, %v1908
        %v2153 = vpack.c.b16 %v1911, %v1909
        %v2154 = vpack.c.b16 %v1914, %v1912
        %v2155 = vpack.c.b16 %v1915, %v1913
        %v2156 = vpack.c.b16 %v1918, %v1916
        %v2157 = vpack.c.b16 %v1919, %v1917
        %v2158 = vpack.c.b16 %v1922, %v1920
        %v2159 = vpack.c.b16 %v1923, %v1921
        %v2160 = vpack.c.b16 %v1926, %v1924
        %v2161 = vpack.c.b16 %v1927, %v1925
        %v2162 = vpack.c.b16 %v1930, %v1928
        %v2163 = vpack.c.b16 %v1931, %v1929
        %v2164 = vpack.c.b16 %v1934, %v1932
        %v2165 = vpack.c.b16 %v1935, %v1933
        %v2166 = vpack.c.b16 %v1938, %v1936
        %v2167 = vpack.c.b16 %v1939, %v1937
        %v2168 = vpack.c.b16 %v1942, %v1940
        %v2169 = vpack.c.b16 %v1943, %v1941
        %v2170 = vpack.c.b16 %v1946, %v1944
        %v2171 = vpack.c.b16 %v1947, %v1945
        %v2172 = vpack.c.b16 %v1950, %v1948
        %v2173 = vpack.c.b16 %v1951, %v1949
        %v2174 = vpack.c.b16 %v1954, %v1952
        %v2175 = vpack.c.b16 %v1955, %v1953
        %v2176 = vpack.c.b16 %v1958, %v1956
        %v2177 = vpack.c.b16 %v1959, %v1957
        %v2178 = vpack.c.b16 %v1962, %v1960
        %v2179 = vpack.c.b16 %v1963, %v1961
        %v2180 = vpack.c.b16 %v1966, %v1964
        %v2181 = vpack.c.b16 %v1967, %v1965
        %v2182 = vpack.c.b16 %v1970, %v1968
        %v2183 = vpack.c.b16 %v1971, %v1969
        %v2184 = vpack.c.b16 %v1974, %v1972
        %v2185 = vpack.c.b16 %v1975, %v1973
        %v2186 = vpack.c.b16 %v1978, %v1976
        %v2187 = vpack.c.b16 %v1979, %v1977
        %v2188 = vpack.c.b16 %v1982, %v1980
        %v2189 = vpack.c.b16 %v1983, %v1981
        %v2190 = vpack.c.b16 %v1986, %v1984
        %v2191 = vpack.c.b16 %v1987, %v1985
        %v2192 = vpack.c.b16 %v1990, %v1988
        %v2193 = vpack.c.b16 %v1991, %v1989
        %v2194 = vpack.c.b16 %v1994, %v1992
        %v2195 = vpack.c.b16 %v1995, %v1993
        %v2196 = vpack.c.b16 %v1998, %v1996
        %v2197 = vpack.c.b16 %v1999, %v1997
        %v2198 = vpack.c.b16 %v2002, %v2000
        %v2199 = vpack.c.b16 %v2003, %v2001
        %v2200 = vpack.c.b16 %v2006, %v2004
        %v2201 = vpack.c.b16 %v2007, %v2005
        %v2202 = vpack.c.b16 %v2010, %v2008
        %v2203 = vpack.c.b16 %v2011, %v2009
        %v2204 = vpack.c.b16 %v2014, %v2012
        %v2205 = vpack.c.b16 %v2015, %v2013
        %v2206 = vpack.c.b16 %v2018, %v2016
        %v2207 = vpack.c.b16 %v2019, %v2017
        %v2208 = vpack.c.b16 %v2022, %v2020
        %v2209 = vpack.c.b16 %v2023, %v2021
        %v2210 = vpack.c.b16 %v2026, %v2024
        %v2211 = vpack.c.b16 %v2027, %v2025
        %v2212 = vpack.c.b16 %v2030, %v2028
        %v2213 = vpack.c.b16 %v2031, %v2029
        %v2214 = vpack.c.b16 %v2034, %v2032
        %v2215 = vpack.c.b16 %v2035, %v2033
        %v2216 = vpack.c.b16 %v2038, %v2036
        %v2217 = vpack.c.b16 %v2039, %v2037
        %v2218 = vpack.c.b16 %v2042, %v2040
        %v2219 = vpack.c.b16 %v2043, %v2041
        %v2220 = vpack.c.b16 %v2046, %v2044
        %v2221 = vpack.c.b16 %v2047, %v2045
        %v2222 = vpack.c.b16 %v2050, %v2048
        %v2223 = vpack.c.b16 %v2051, %v2049
        %v2224 = vpack.c.b16 %v2054, %v2052
        %v2225 = vpack.c.b16 %v2055, %v2053
        %v2226 = vpack.c.b16 %v2058, %v2056
        %v2227 = vpack.c.b16 %v2059, %v2057
        %v2228 = vpack.c.b16 %v2062, %v2060
        %v2229 = vpack.c.b16 %v2063, %v2061
        %v2230 = vpack.c.b16 %v2066, %v2064
        %v2231 = vpack.c.b16 %v2067, %v2065
        %v2232 = vpack.c.b16 %v2070, %v2068
        %v2233 = vpack.c.b16 %v2071, %v2069
        %v2234 = vpack.c.b16 %v2074, %v2072
        %v2235 = vpack.c.b16 %v2075, %v2073
        %v2236 = vpack.c.b16 %v2078, %v2076
        %v2237 = vpack.c.b16 %v2079, %v2077
        %v2238 = vpack.c.b16 %v2082, %v2080
        %v2239 = vpack.c.b16 %v2083, %v2081
        %v2240 = vpack.c.b16 %v2086, %v2084
        %v2241 = vpack.c.b16 %v2087, %v2085
        %v2242 = vpack.c.b16 %v2090, %v2088
        %v2243 = vpack.c.b16 %v2091, %v2089
        %v2244 = vpack.c.b16 %v2094, %v2092
        %v2245 = vpack.c.b16 %v2095, %v2093
        %v2246 = vpack.c.b16 %v2098, %v2096
        %v2247 = vpack.c.b16 %v2099, %v2097
        %v2248 = vpack.c.b16 %v2102, %v2100
        %v2249 = vpack.c.b16 %v2103, %v2101
        %v2250 = vpack.c.b16 %v2106, %v2104
        %v2251 = vpack.c.b16 %v2107, %v2105
        %v2252 = vpack.c.b16 %v2110, %v2108
        %v2253 = vpack.c.b16 %v2111, %v2109
        %v2254 = vpack.c.b16 %v2114, %v2112
        %v2255 = vpack.c.b16 %v2115, %v2113
        %v2256 = vpack.c.b16 %v2118, %v2116
        %v2257 = vpack.c.b16 %v2119, %v2117
        %v2258 = vpack.c.b16 %v2122, %v2120
        %v2259 = vpack.c.b16 %v2123, %v2121
        %v2260 = vpack.c.b16 %v2126, %v2124
        %v2261 = vpack.c.b16 %v2127, %v2125
        %v2262 = vpack.c.b16 %v2130, %v2128
        %v2263 = vpack.c.b16 %v2131, %v2129
        %v2264 = vpack.c.b16 %v2134, %v2132
        %v2265 = vpack.c.b16 %v2135, %v2133
        %v2266 = vpack.c.b16 %v2138, %v2136
        %v2267 = vpack.c.b16 %v2139, %v2137
        %2396 = vmatprep.subr.bf16.mxu0 %v2141
        %2397 = vmatpush1.bf16.msra.mxu0 %v2140
        %2398 = vmatprep.subr.bf16.mxu0 %v2143
        %2399 = vmatpush1.bf16.msra.mxu0 %v2142
        %2400 = vmatprep.subr.bf16.mxu0 %v2145
        %2401 = vmatpush1.bf16.msra.mxu0 %v2144
        %2402 = vmatprep.subr.bf16.mxu0 %v2147
        %2403 = vmatpush1.bf16.msra.mxu0 %v2146
        %2404 = vmatprep.subr.bf16.mxu0 %v2149
        %2405 = vmatpush1.bf16.msra.mxu0 %v2148
        %2406 = vmatprep.subr.bf16.mxu0 %v2151
        %2407 = vmatpush1.bf16.msra.mxu0 %v2150
        %2408 = vmatprep.subr.bf16.mxu0 %v2153
        %2409 = vmatpush1.bf16.msra.mxu0 %v2152
        %2410 = vmatprep.subr.bf16.mxu0 %v2155
        %2411 = vmatpush1.bf16.msra.mxu0 %v2154
        %2412 = vmatprep.subr.bf16.mxu0 %v2157
        %2413 = vmatpush1.bf16.msra.mxu0 %v2156
        %2414 = vmatprep.subr.bf16.mxu0 %v2159
        %2415 = vmatpush1.bf16.msra.mxu0 %v2158
        %2416 = vmatprep.subr.bf16.mxu0 %v2161
        %2417 = vmatpush1.bf16.msra.mxu0 %v2160
        %2418 = vmatprep.subr.bf16.mxu0 %v2163
        %2419 = vmatpush1.bf16.msra.mxu0 %v2162
        %2420 = vmatprep.subr.bf16.mxu0 %v2165
        %2421 = vmatpush1.bf16.msra.mxu0 %v2164
        %2422 = vmatprep.subr.bf16.mxu0 %v2167
        %2423 = vmatpush1.bf16.msra.mxu0 %v2166
        %2424 = vmatprep.subr.bf16.mxu0 %v2169
        %2425 = vmatpush1.bf16.msra.mxu0 %v2168
        %2426 = vmatprep.subr.bf16.mxu0 %v2171
        %2427 = vmatpush1.bf16.msra.mxu0 %v2170
        %2428 = vmatprep.mubr.bf16.mxu0 %v1609
        %2429 = vmatmul.mubr.bf16.gmra.mrb[0].mxu0 %v1608
        %v2430 = vpop.f32.mrb[0].mxu0
        %v2431 = vadd.f32 %v1749, %v2430
        %v2432 = vpop.f32.mrb[0].mxu0
        %v2433 = vadd.f32 %v1753, %v2432
        %v2434 = vpop.f32.mrb[0].mxu0
        %v2435 = vadd.f32 %v1749, %v2434
        %v2436 = vpop.f32.mrb[0].mxu0
        %v2437 = vadd.f32 %v1753, %v2436
        %2438 = vdwg.mxu0
        %2439 = vmatprep.subr.bf16.mxu0 %v2173
        %2440 = vmatpush1.bf16.msra.mxu0 %v2172
        %2441 = vmatprep.subr.bf16.mxu0 %v2175
        %2442 = vmatpush1.bf16.msra.mxu0 %v2174
        %2443 = vmatprep.subr.bf16.mxu0 %v2177
        %2444 = vmatpush1.bf16.msra.mxu0 %v2176
        %2445 = vmatprep.subr.bf16.mxu0 %v2179
        %2446 = vmatpush1.bf16.msra.mxu0 %v2178
        %2447 = vmatprep.subr.bf16.mxu0 %v2181
        %2448 = vmatpush1.bf16.msra.mxu0 %v2180
        %2449 = vmatprep.subr.bf16.mxu0 %v2183
        %2450 = vmatpush1.bf16.msra.mxu0 %v2182
        %2451 = vmatprep.subr.bf16.mxu0 %v2185
        %2452 = vmatpush1.bf16.msra.mxu0 %v2184
        %2453 = vmatprep.subr.bf16.mxu0 %v2187
        %2454 = vmatpush1.bf16.msra.mxu0 %v2186
        %2455 = vmatprep.subr.bf16.mxu0 %v2189
        %2456 = vmatpush1.bf16.msra.mxu0 %v2188
        %2457 = vmatprep.subr.bf16.mxu0 %v2191
        %2458 = vmatpush1.bf16.msra.mxu0 %v2190
        %2459 = vmatprep.subr.bf16.mxu0 %v2193
        %2460 = vmatpush1.bf16.msra.mxu0 %v2192
        %2461 = vmatprep.subr.bf16.mxu0 %v2195
        %2462 = vmatpush1.bf16.msra.mxu0 %v2194
        %2463 = vmatprep.subr.bf16.mxu0 %v2197
        %2464 = vmatpush1.bf16.msra.mxu0 %v2196
        %2465 = vmatprep.subr.bf16.mxu0 %v2199
        %2466 = vmatpush1.bf16.msra.mxu0 %v2198
        %2467 = vmatprep.subr.bf16.mxu0 %v2201
        %2468 = vmatpush1.bf16.msra.mxu0 %v2200
        %2469 = vmatprep.subr.bf16.mxu0 %v2203
        %2470 = vmatpush1.bf16.msra.mxu0 %v2202
        %2471 = vmatprep.mubr.bf16.mxu0 %v1611
        %2472 = vmatmul.mubr.bf16.gmra.mrb[0].mxu0 %v1610
        %v2473 = vpop.f32.mrb[0].mxu0
        %v2474 = vadd.f32 %v2431, %v2473
        %v2475 = vpop.f32.mrb[0].mxu0
        %v2476 = vadd.f32 %v2433, %v2475
        %v2477 = vpop.f32.mrb[0].mxu0
        %v2478 = vadd.f32 %v2435, %v2477
        %v2479 = vpop.f32.mrb[0].mxu0
        %v2480 = vadd.f32 %v2437, %v2479
        %2481 = vdwg.mxu0
        %2482 = vmatprep.subr.bf16.mxu0 %v2205
        %2483 = vmatpush1.bf16.msra.mxu0 %v2204
        %2484 = vmatprep.subr.bf16.mxu0 %v2207
        %2485 = vmatpush1.bf16.msra.mxu0 %v2206
        %2486 = vmatprep.subr.bf16.mxu0 %v2209
        %2487 = vmatpush1.bf16.msra.mxu0 %v2208
        %2488 = vmatprep.subr.bf16.mxu0 %v2211
        %2489 = vmatpush1.bf16.msra.mxu0 %v2210
        %2490 = vmatprep.subr.bf16.mxu0 %v2213
        %2491 = vmatpush1.bf16.msra.mxu0 %v2212
        %2492 = vmatprep.subr.bf16.mxu0 %v2215
        %2493 = vmatpush1.bf16.msra.mxu0 %v2214
        %2494 = vmatprep.subr.bf16.mxu0 %v2217
        %2495 = vmatpush1.bf16.msra.mxu0 %v2216
        %2496 = vmatprep.subr.bf16.mxu0 %v2219
        %2497 = vmatpush1.bf16.msra.mxu0 %v2218
        %2498 = vmatprep.subr.bf16.mxu0 %v2221
        %2499 = vmatpush1.bf16.msra.mxu0 %v2220
        %2500 = vmatprep.subr.bf16.mxu0 %v2223
        %2501 = vmatpush1.bf16.msra.mxu0 %v2222
        %2502 = vmatprep.subr.bf16.mxu0 %v2225
        %2503 = vmatpush1.bf16.msra.mxu0 %v2224
        %2504 = vmatprep.subr.bf16.mxu0 %v2227
        %2505 = vmatpush1.bf16.msra.mxu0 %v2226
        %2506 = vmatprep.subr.bf16.mxu0 %v2229
        %2507 = vmatpush1.bf16.msra.mxu0 %v2228
        %2508 = vmatprep.subr.bf16.mxu0 %v2231
        %2509 = vmatpush1.bf16.msra.mxu0 %v2230
        %2510 = vmatprep.subr.bf16.mxu0 %v2233
        %2511 = vmatpush1.bf16.msra.mxu0 %v2232
        %2512 = vmatprep.subr.bf16.mxu0 %v2235
        %2513 = vmatpush1.bf16.msra.mxu0 %v2234
        %2514 = vmatprep.mubr.bf16.mxu0 %v1613
        %2515 = vmatmul.mubr.bf16.gmra.mrb[0].mxu0 %v1612
        %v2516 = vpop.f32.mrb[0].mxu0
        %v2517 = vadd.f32 %v2474, %v2516
        %v2518 = vpop.f32.mrb[0].mxu0
        %v2519 = vadd.f32 %v2476, %v2518
        %v2520 = vpop.f32.mrb[0].mxu0
        %v2521 = vadd.f32 %v2478, %v2520
        %v2522 = vpop.f32.mrb[0].mxu0
        %v2523 = vadd.f32 %v2480, %v2522
        %2524 = vdwg.mxu0
        %2525 = vmatprep.subr.bf16.mxu0 %v2237
        %2526 = vmatpush1.bf16.msra.mxu0 %v2236
        %2527 = vmatprep.subr.bf16.mxu0 %v2239
        %2528 = vmatpush1.bf16.msra.mxu0 %v2238
        %2529 = vmatprep.subr.bf16.mxu0 %v2241
        %2530 = vmatpush1.bf16.msra.mxu0 %v2240
        %2531 = vmatprep.subr.bf16.mxu0 %v2243
        %2532 = vmatpush1.bf16.msra.mxu0 %v2242
        %2533 = vmatprep.subr.bf16.mxu0 %v2245
        %2534 = vmatpush1.bf16.msra.mxu0 %v2244
        %2535 = vmatprep.subr.bf16.mxu0 %v2247
        %2536 = vmatpush1.bf16.msra.mxu0 %v2246
        %2537 = vmatprep.subr.bf16.mxu0 %v2249
        %2538 = vmatpush1.bf16.msra.mxu0 %v2248
        %2539 = vmatprep.subr.bf16.mxu0 %v2251
        %2540 = vmatpush1.bf16.msra.mxu0 %v2250
        %2541 = vmatprep.subr.bf16.mxu0 %v2253
        %2542 = vmatpush1.bf16.msra.mxu0 %v2252
        %2543 = vmatprep.subr.bf16.mxu0 %v2255
        %2544 = vmatpush1.bf16.msra.mxu0 %v2254
        %2545 = vmatprep.subr.bf16.mxu0 %v2257
        %2546 = vmatpush1.bf16.msra.mxu0 %v2256
        %2547 = vmatprep.subr.bf16.mxu0 %v2259
        %2548 = vmatpush1.bf16.msra.mxu0 %v2258
        %2549 = vmatprep.subr.bf16.mxu0 %v2261
        %2550 = vmatpush1.bf16.msra.mxu0 %v2260
        %2551 = vmatprep.subr.bf16.mxu0 %v2263
        %2552 = vmatpush1.bf16.msra.mxu0 %v2262
        %2553 = vmatprep.subr.bf16.mxu0 %v2265
        %2554 = vmatpush1.bf16.msra.mxu0 %v2264
        %2555 = vmatprep.subr.bf16.mxu0 %v2267
        %2556 = vmatpush1.bf16.msra.mxu0 %v2266
        %2557 = vmatprep.mubr.bf16.mxu0 %v1615
        %2558 = vmatmul.mubr.bf16.gmra.mrb[0].mxu0 %v1614
        %v2559 = vpop.f32.mrb[0].mxu0
        %v2560 = vadd.f32 %v2517, %v2559
        %v2561 = vpop.f32.mrb[0].mxu0
        %v2562 = vadd.f32 %v2519, %v2561
        %v2563 = vpop.f32.mrb[0].mxu0
        %v2564 = vadd.f32 %v2521, %v2563
        %v2565 = vpop.f32.mrb[0].mxu0
        %v2566 = vadd.f32 %v2523, %v2565
        %2567 = vdwg.mxu0
        %v2568 = vadd.f32 %v2560, %v495
        %v2569 = vadd.f32 %v2562, %v496
        %v2570 = vadd.f32 %v2564, %v497
        %v2571 = vadd.f32 %v2566, %v498
        %2572 = vst [vmem:[#allocation14] sm:$0xff] %v2568
        %2573 = vst [vmem:[#allocation14 + $0x8] sm:$0xff] %v2569
        %2574 = vst [vmem:[#allocation14 + $0x10] sm:$0xff] %v2570
        %2575 = vst [vmem:[#allocation14 + $0x18] sm:$0xff] %v2571
        // Predicated region
        $region81: #{tpu_custom_call.1} parent=47 // pred_check
          %p2576 = pneg %p219
        $region82: #{tpu_custom_call.1} parent=47 // pred_check_branch
          %2578 = sbr.rel (%p2576) target = $region84
        $region83: #{tpu_custom_call.1} parent=47 // pred_region
          %s2580 = ssub.s32 512, 512
          %2581 = vsyncadd [#allocation4], %s2580
          %s2582 = sshll.u32 [#allocation14], 4
          %s2583 = int_to_ptr.vmem [resolvable:$true] %s2582
          %2588 = dma.vmem_to_hbm [thread:$0]  %s2583, 512, %s7, [#allocation4], 256, 256, 16
        $region84: #{tpu_custom_call.1} parent=47 // pred_fallthru
          _
        // Predicated region
        $region85: #{tpu_custom_call.1} parent=47 // pred_check
          %p2589 = pneg %p219
        $region86: #{tpu_custom_call.1} parent=47 // pred_check_branch
          %2591 = sbr.rel (%p2589) target = $region88
        $region87: #{tpu_custom_call.1} parent=47 // pred_region
          %2592 = dma.done [#allocation4], 512
        $region88: #{tpu_custom_call.1} parent=47 // pred_fallthru
          _
      $region48: #{tpu_custom_call.1} parent=5 // pred_fallthru
        _
      %p2593 = scmp.le.s32.totalorder 2, %s24
      // Predicated region
      $region89: #{tpu_custom_call.1} parent=5 // pred_check
        %p2594 = pneg %p2593
      $region90: #{tpu_custom_call.1} parent=5 // pred_check_branch
        %2596 = sbr.rel (%p2594) target = $region92
      $region91: #{tpu_custom_call.1} parent=5 // pred_region
        %s2597 = ssub.s32 %s24, 2
      $region92: #{tpu_custom_call.1} parent=5 // pred_fallthru
        _
    $region6: #{tpu_custom_call.1} parent=1 // loop_footer
      %s28 = sadd.s32 1, %s24
    $region7: #{tpu_custom_call.1} parent=1 // loop_footer_branch
      %23 = sbr.rel target = $region3
    $region8: #{tpu_custom_call.1} parent=1 // loop_exit
      _
    %2598 = vsyncpa [#allocation3], 1
    %s2599 = scalar_lea.sflag [#allocation3], 1
    %2600 = vsyncpa %s2599, 1
    %2601 = vsyncpa [#allocation6], 1
    %s2602 = scalar_lea.sflag [#allocation6], 1
    %2603 = vsyncpa %s2602, 1
    %2604 = vsyncpa [#allocation9], 1
    %s2605 = scalar_lea.sflag [#allocation9], 1
    %2606 = vsyncpa %s2605, 1
    %2607 = vsyncpa [#allocation12], 1
    %s2608 = scalar_lea.sflag [#allocation12], 1
    %2609 = vsyncpa %s2608, 1
    %2610 = vsyncpa [#allocation4], 1
    %s2611 = scalar_lea.sflag [#allocation4], 1
    %2612 = vsyncpa %s2611, 1

</llo_original>
